<compile_context>
chip_gen: v6e
topology: v6e:2x2x1
jax: 0.10.0
libtpu: 0.0.40
codegen_flags: <defaults>
</compile_context>

<pallas_src>
import functools

import jax
import jax.numpy as jnp
from jax.experimental import pallas as pl
from jax.experimental.pallas import tpu as pltpu


# ---------------------------------------------------------------------------
# activations (eval-mode semantics)
# ---------------------------------------------------------------------------
def _rrelu_eval(x):
    # RReLU(lower=0.1, upper=0.3) in eval mode: slope = (0.1 + 0.3) / 2 = 0.2
    # TODO(synk): training-mode RReLU samples a random slope per element; only
    # eval-mode (deterministic) semantics are implemented here.
    return jnp.where(x >= 0, x, 0.2 * x)


# ---------------------------------------------------------------------------
# Single fused kernel: both GCN stacks + value head + GRLMLP head
# ---------------------------------------------------------------------------
def _fused_gnn_heads_kernel(
        # graph data
        av_ref, xv_ref, ae_ref, xe_ref, nd_ref, mask_ref,
        # vertiport GCN weights (conv4 zero-padded to hidden width)
        vgw1, vgb1, vgw2, vgb2, vgw3, vgb3, vgw4, vgb4,
        # evtol GCN weights (conv4 zero-padded to hidden width)
        egw1, egb1, egw2, egb2, egw3, egb3, egw4, egb4,
        # value head (first two layers bias-free)
        vw1, vw2, vw3, vb3,
        # policy head (GRLMLP)
        pw1, pb1, pw2, pb2, pw3, pb3, pw4, pb4,
        # single lane-dense output slab
        out_ref,
        *, batch, n_v, n_e, c_out_v, c_out_e, out_pad):

    def gcn_stack(A, x, w1, b1, w2, b2, w3, b3, w4, b4, n_nodes, c_out):
        # A is the block-diagonal batched A_hat: one matmul covers all B graphs.
        def gconv(h, w_ref, b_ref):
            xw = jnp.dot(h, w_ref[...], preferred_element_type=jnp.float32)
            return jnp.dot(A, xw, preferred_element_type=jnp.float32) + b_ref[...]

        h1 = gconv(x, w1, b1)                               # gcn_layer1_prev
        h2 = gconv(_rrelu_eval(h1), w2, b2) + h1            # gcn_layer2_prev
        h3 = gconv(_rrelu_eval(h2), w3, b3) + h2            # gcn_layer3_prev
        # conv4 weight/bias are zero-padded up to the hidden width, so the
        # residual add is full width (no sub-lane slice); the padded columns
        # (== h3[:, c_out:]) are dropped after the node-mean below.
        h4 = gconv(_rrelu_eval(h3), w4, b4) + h3
        # per-graph node mean (rows of each graph are sublane-aligned blocks)
        rows = [jnp.mean(h4[i * n_nodes:(i + 1) * n_nodes, :],
                         axis=0, keepdims=True) for i in range(batch)]
        return jnp.concatenate(rows, axis=0)[:, :c_out]     # (B, c_out)

    verti_emb = gcn_stack(av_ref[...], xv_ref[...],
                          vgw1, vgb1, vgw2, vgb2, vgw3, vgb3, vgw4, vgb4,
                          n_v, c_out_v)
    ev_emb = gcn_stack(ae_ref[...], xe_ref[...],
                       egw1, egb1, egw2, egb2, egw3, egb3, egw4, egb4,
                       n_e, c_out_e)

    # final_features = cat(verti_embed, ev_embed, next_drone)
    ff = jnp.concatenate([verti_emb, ev_emb, nd_ref[...]], axis=1)   # (B, D)

    # --- value net: Linear(no bias) -> tanh -> Linear(no bias) -> tanh -> Linear
    v = jnp.tanh(jnp.dot(ff, vw1[...], preferred_element_type=jnp.float32))
    v = jnp.tanh(jnp.dot(v, vw2[...], preferred_element_type=jnp.float32))
    value = jnp.dot(v, vw3[...], preferred_element_type=jnp.float32) + vb3[...]

    # --- GRLMLP policy head
    h = _rrelu_eval(jnp.dot(ff, pw1[...], preferred_element_type=jnp.float32) + pb1[...])
    h = _rrelu_eval(jnp.dot(h, pw2[...], preferred_element_type=jnp.float32) + pb2[...])
    h = _rrelu_eval(jnp.dot(h, pw3[...], preferred_element_type=jnp.float32) + pb3[...])
    y = jnp.dot(h, pw4[...], preferred_element_type=jnp.float32) + pb4[...]

    # ypred[mask] = -inf, then log_softmax over the last dim.
    # TODO(synk): a fully-masked row yields NaN, matching the PyTorch original.
    y = jnp.where(mask_ref[...] > 0.5, jnp.float32(-jnp.inf), y)
    m = jnp.max(y, axis=-1, keepdims=True)
    z = y - m
    logp = z - jnp.log(jnp.sum(jnp.exp(z), axis=-1, keepdims=True))

    # single unmasked, lane-dense store: [final_features | value | logp | 0-pad]
    pad_cols = out_pad - (ff.shape[1] + value.shape[1] + logp.shape[1])
    pad = jnp.zeros((batch, pad_cols), jnp.float32)
    out_ref[...] = jnp.concatenate([ff, value, logp, pad], axis=1)


# ---------------------------------------------------------------------------
# Forward wrapper (one Pallas launch; A_hat precomputed outside)
# ---------------------------------------------------------------------------
@jax.jit
def gnn_feature_extractor_forward(a_v_bd, a_e_bd, verti_x, ev_x,
                                  next_drone, mask, params):
    B, Nv, Civ = verti_x.shape
    _, Ne, Cie = ev_x.shape
    c_out_v = params["vertiport"]["w4"].shape[1]
    c_out_e = params["evtols"]["w4"].shape[1]
    n_act = params["mlp"]["w4"].shape[1]
    ff_dim = c_out_v + c_out_e + next_drone.shape[1]
    out_pad = int(128 * pl.cdiv(ff_dim + 1 + n_act, 128))   # lane-dense slab

    xv = verti_x.astype(jnp.float32).reshape(B * Nv, Civ)
    xe = ev_x.astype(jnp.float32).reshape(B * Ne, Cie)
    nd = next_drone.astype(jnp.float32)
    mask_f32 = mask.astype(jnp.float32)

    pv, pe = params["vertiport"], params["evtols"]
    vp, mp = params["value"], params["mlp"]

    operands = (
        a_v_bd, xv, a_e_bd, xe, nd, mask_f32,
        pv["w1"], pv["b1"], pv["w2"], pv["b2"], pv["w3"], pv["b3"], pv["w4p"], pv["b4p"],
        pe["w1"], pe["b1"], pe["w2"], pe["b2"], pe["w3"], pe["b3"], pe["w4p"], pe["b4p"],
        vp["w1"], vp["w2"], vp["w3"], vp["b3"],
        mp["w1"], mp["b1"], mp["w2"], mp["b2"], mp["w3"], mp["b3"], mp["w4"], mp["b4"],
    )

    kernel = functools.partial(
        _fused_gnn_heads_kernel,
        batch=B, n_v=Nv, n_e=Ne,
        c_out_v=c_out_v, c_out_e=c_out_e, out_pad=out_pad)

    out = pl.pallas_call(
        kernel,
        out_shape=jax.ShapeDtypeStruct((B, out_pad), jnp.float32),
        in_specs=[pl.BlockSpec(memory_space=pltpu.MemorySpace.VMEM)] * len(operands),
        out_specs=pl.BlockSpec(memory_space=pltpu.MemorySpace.VMEM),
    )(*operands)

    final_features = out[:, :ff_dim]
    value = out[:, ff_dim:ff_dim + 1]
    log_probs = out[:, ff_dim + 1:ff_dim + 1 + n_act]
    return final_features, value, log_probs


# ---------------------------------------------------------------------------
# Plain-JAX glue (run ONCE, outside the per-step forward path)
# ---------------------------------------------------------------------------
def build_a_hat(edge_index, num_nodes):
    """A_hat = D^-1/2 (A + I) D^-1/2 (PyG gcn_norm with self loops, exact for
    symmetric edge lists).  edge_index: (2, E) int."""
    src, dst = edge_index[0], edge_index[1]
    A = jnp.zeros((num_nodes, num_nodes), jnp.float32).at[dst, src].add(1.0)
    A = A + jnp.eye(num_nodes, dtype=jnp.float32)
    deg = jnp.sum(A, axis=1)
    dinv = jax.lax.rsqrt(deg)
    return dinv[:, None] * A * dinv[None, :]


def block_diag_a_hat(a_hat, batch):
    """Batched (shared-graph) adjacency as a block-diagonal (B*N, B*N) matrix."""
    return jnp.kron(jnp.eye(batch, dtype=jnp.float32), a_hat)


def pad_conv4(gcn_params, hidden):
    """Zero-pad conv4 weight/bias to the hidden width (enables a full-width
    layer-4 residual inside the kernel)."""
    w4, b4 = gcn_params["w4"], gcn_params["b4"]
    c_out = w4.shape[1]
    out = dict(gcn_params)
    out["w4p"] = jnp.pad(w4, ((0, 0), (0, hidden - c_out)))
    out["b4p"] = jnp.pad(b4, ((0, 0), (0, hidden - c_out)))
    return out


def init_linear(key, d_in, d_out, scale=0.1):
    kw, kb = jax.random.split(key)
    return (jax.random.normal(kw, (d_in, d_out), jnp.float32) * scale,
            jax.random.normal(kb, (1, d_out), jnp.float32) * scale)


def init_gcn_params(key, c_in, hidden, c_out):
    ks = jax.random.split(key, 4)
    p = {}
    p["w1"], p["b1"] = init_linear(ks[0], c_in, hidden)
    p["w2"], p["b2"] = init_linear(ks[1], hidden, hidden)
    p["w3"], p["b3"] = init_linear(ks[2], hidden, hidden)
    p["w4"], p["b4"] = init_linear(ks[3], hidden, c_out)
    return pad_conv4(p, hidden)


# ---------------------------------------------------------------------------
# main
# ---------------------------------------------------------------------------
if __name__ == "__main__":
    key = jax.random.PRNGKey(0)
    ks = list(jax.random.split(key, 16))

    # ---- config (what policy_kwargs / observation_space would provide) ----
    B = 2
    Nv, Ne = 8, 8
    verti_in, verti_hidden, verti_out = 4, 32, 16
    ev_in, ev_hidden, ev_out = 6, 32, 16
    next_evtol_feature_size = 8
    input_dim = verti_out + ev_out + next_evtol_feature_size      # 40
    mlp_hidden2 = 32
    value_hidden1, value_hidden2 = 64, 32
    # faithful to the __init__ aliasing bug: mlp_hidden1 ends up == value_hidden2
    mlp_hidden1 = value_hidden2
    latent_pi_dim, latent_vf_dim = 11, 1

    # ---- parameters (deterministic, synthetic) ----
    params = {
        "vertiport": init_gcn_params(ks[0], verti_in, verti_hidden, verti_out),
        "evtols": init_gcn_params(ks[1], ev_in, ev_hidden, ev_out),
    }
    mlp = {}
    mlp["w1"], mlp["b1"] = init_linear(ks[2], input_dim, mlp_hidden1)
    mlp["w2"], mlp["b2"] = init_linear(ks[3], mlp_hidden1, mlp_hidden1)
    mlp["w3"], mlp["b3"] = init_linear(ks[4], mlp_hidden1, mlp_hidden2)
    mlp["w4"], mlp["b4"] = init_linear(ks[5], mlp_hidden2, latent_pi_dim)
    params["mlp"] = mlp

    value = {}
    value["w1"] = jax.random.normal(ks[6], (input_dim, value_hidden1), jnp.float32) * 0.1     # no bias
    value["w2"] = jax.random.normal(ks[7], (value_hidden1, value_hidden2), jnp.float32) * 0.1  # no bias
    value["w3"], value["b3"] = init_linear(ks[8], value_hidden2, latent_vf_dim)
    params["value"] = value

    # ---- inputs (deterministic, synthetic observation) ----
    def ring_edges(n):
        src = jnp.arange(n, dtype=jnp.int32)
        dst = (src + 1) % n
        # symmetric edge list (both directions)
        return jnp.stack([jnp.concatenate([src, dst]),
                          jnp.concatenate([dst, src])], axis=0)

    verti_edge_single = ring_edges(Nv)     # (2, 16)
    ev_edge_single = ring_edges(Ne)        # (2, 16)

    data = {
        "vertiport_features": jax.random.normal(ks[9], (B, Nv, verti_in), jnp.float32),
        "vertiport_edge": jnp.stack([verti_edge_single] * B, axis=0),   # (B, 2, E) -> [0] used
        "evtol_features": jax.random.normal(ks[10], (B, Ne, ev_in), jnp.float32),
        "evtol_edge": jnp.stack([ev_edge_single] * B, axis=0),
        "next_evtol_embedding": jax.random.normal(ks[11], (B, next_evtol_feature_size), jnp.float32),
        "mask": (jax.random.uniform(ks[12], (B, latent_pi_dim)) < 0.2),
    }

    # Hoisted out of the per-forward path: edges are static, build A_hat once.
    a_hat_v = build_a_hat(data["vertiport_edge"][0].astype(jnp.int32), Nv)
    a_hat_e = build_a_hat(data["evtol_edge"][0].astype(jnp.int32), Ne)
    a_v_bd = block_diag_a_hat(a_hat_v, B)   # (B*Nv, B*Nv)
    a_e_bd = block_diag_a_hat(a_hat_e, B)   # (B*Ne, B*Ne)

    final_features, value_out, logp_out = gnn_feature_extractor_forward(
        a_v_bd, a_e_bd,
        data["vertiport_features"], data["evtol_features"],
        data["next_evtol_embedding"], data["mask"], params)
    jax.block_until_ready((final_features, value_out, logp_out))

    assert final_features.shape == (B, input_dim)
    assert value_out.shape == (B, latent_vf_dim)
    assert logp_out.shape == (B, latent_pi_dim)
    assert bool(jnp.all(jnp.isfinite(final_features)))
    print("KERNEL_OK")
</pallas_src>

<mosaic_0001>
module attributes {stable_mosaic.version = 11 : i64} {
  func.func @_fused_gnn_heads_kernel(%arg0: memref<16x16xf32, #tpu.memory_space<vmem>>, %arg1: memref<16x4xf32, #tpu.memory_space<vmem>>, %arg2: memref<16x16xf32, #tpu.memory_space<vmem>>, %arg3: memref<16x6xf32, #tpu.memory_space<vmem>>, %arg4: memref<2x8xf32, #tpu.memory_space<vmem>>, %arg5: memref<2x11xf32, #tpu.memory_space<vmem>>, %arg6: memref<4x32xf32, #tpu.memory_space<vmem>>, %arg7: memref<1x32xf32, #tpu.memory_space<vmem>>, %arg8: memref<32x32xf32, #tpu.memory_space<vmem>>, %arg9: memref<1x32xf32, #tpu.memory_space<vmem>>, %arg10: memref<32x32xf32, #tpu.memory_space<vmem>>, %arg11: memref<1x32xf32, #tpu.memory_space<vmem>>, %arg12: memref<32x32xf32, #tpu.memory_space<vmem>>, %arg13: memref<1x32xf32, #tpu.memory_space<vmem>>, %arg14: memref<6x32xf32, #tpu.memory_space<vmem>>, %arg15: memref<1x32xf32, #tpu.memory_space<vmem>>, %arg16: memref<32x32xf32, #tpu.memory_space<vmem>>, %arg17: memref<1x32xf32, #tpu.memory_space<vmem>>, %arg18: memref<32x32xf32, #tpu.memory_space<vmem>>, %arg19: memref<1x32xf32, #tpu.memory_space<vmem>>, %arg20: memref<32x32xf32, #tpu.memory_space<vmem>>, %arg21: memref<1x32xf32, #tpu.memory_space<vmem>>, %arg22: memref<40x64xf32, #tpu.memory_space<vmem>>, %arg23: memref<64x32xf32, #tpu.memory_space<vmem>>, %arg24: memref<32x1xf32, #tpu.memory_space<vmem>>, %arg25: memref<1x1xf32, #tpu.memory_space<vmem>>, %arg26: memref<40x32xf32, #tpu.memory_space<vmem>>, %arg27: memref<1x32xf32, #tpu.memory_space<vmem>>, %arg28: memref<32x32xf32, #tpu.memory_space<vmem>>, %arg29: memref<1x32xf32, #tpu.memory_space<vmem>>, %arg30: memref<32x32xf32, #tpu.memory_space<vmem>>, %arg31: memref<1x32xf32, #tpu.memory_space<vmem>>, %arg32: memref<32x11xf32, #tpu.memory_space<vmem>>, %arg33: memref<1x11xf32, #tpu.memory_space<vmem>>, %arg34: memref<2x128xf32, #tpu.memory_space<vmem>>) attributes {dimension_semantics = [], scalar_prefetch = 0 : i64, scratch_operands = 0 : i64, tpu.core_type = #tpu.core_type<tc>} {
    %c0 = arith.constant 0 : index
    %c0_0 = arith.constant 0 : index
    %0 = vector.load %arg0[%c0, %c0_0] : memref<16x16xf32, #tpu.memory_space<vmem>>, vector<16x16xf32>
    %c0_1 = arith.constant 0 : index
    %c0_2 = arith.constant 0 : index
    %1 = vector.load %arg1[%c0_1, %c0_2] : memref<16x4xf32, #tpu.memory_space<vmem>>, vector<16x4xf32>
    %c0_3 = arith.constant 0 : index
    %c0_4 = arith.constant 0 : index
    %2 = vector.load %arg6[%c0_3, %c0_4] : memref<4x32xf32, #tpu.memory_space<vmem>>, vector<4x32xf32>
    %cst = arith.constant dense<0.000000e+00> : vector<16x32xf32>
    %3 = tpu.matmul %1, %2, %cst {dimension_numbers = #tpu.dot_dimension_numbers<[1], [0], [0], [1], [0, 0, 1, 1], [], []>} : vector<16x4xf32>, vector<4x32xf32>, vector<16x32xf32> -> vector<16x32xf32>
    %cst_5 = arith.constant dense<0.000000e+00> : vector<16x32xf32>
    %4 = tpu.matmul %0, %3, %cst_5 {dimension_numbers = #tpu.dot_dimension_numbers<[1], [0], [0], [1], [0, 0, 1, 1], [], []>} : vector<16x16xf32>, vector<16x32xf32>, vector<16x32xf32> -> vector<16x32xf32>
    %c0_6 = arith.constant 0 : index
    %c0_7 = arith.constant 0 : index
    %5 = vector.load %arg7[%c0_6, %c0_7] : memref<1x32xf32, #tpu.memory_space<vmem>>, vector<1x32xf32>
    %6 = vector.broadcast %5 : vector<1x32xf32> to vector<16x32xf32>
    %7 = arith.addf %4, %6 : vector<16x32xf32>
    %cst_8 = arith.constant 0.000000e+00 : f32
    %8 = vector.broadcast %cst_8 : f32 to vector<16x32xf32>
    %9 = arith.cmpf oge, %7, %8 : vector<16x32xf32>
    %cst_9 = arith.constant 2.000000e-01 : f32
    %10 = vector.broadcast %cst_9 : f32 to vector<16x32xf32>
    %11 = arith.mulf %10, %7 : vector<16x32xf32>
    %12 = arith.select %9, %7, %11 : vector<16x32xi1>, vector<16x32xf32>
    %c0_10 = arith.constant 0 : index
    %c0_11 = arith.constant 0 : index
    %13 = vector.load %arg8[%c0_10, %c0_11] : memref<32x32xf32, #tpu.memory_space<vmem>>, vector<32x32xf32>
    %cst_12 = arith.constant dense<0.000000e+00> : vector<16x32xf32>
    %14 = tpu.matmul %12, %13, %cst_12 {dimension_numbers = #tpu.dot_dimension_numbers<[1], [0], [0], [1], [0, 0, 1, 1], [], []>} : vector<16x32xf32>, vector<32x32xf32>, vector<16x32xf32> -> vector<16x32xf32>
    %cst_13 = arith.constant dense<0.000000e+00> : vector<16x32xf32>
    %15 = tpu.matmul %0, %14, %cst_13 {dimension_numbers = #tpu.dot_dimension_numbers<[1], [0], [0], [1], [0, 0, 1, 1], [], []>} : vector<16x16xf32>, vector<16x32xf32>, vector<16x32xf32> -> vector<16x32xf32>
    %c0_14 = arith.constant 0 : index
    %c0_15 = arith.constant 0 : index
    %16 = vector.load %arg9[%c0_14, %c0_15] : memref<1x32xf32, #tpu.memory_space<vmem>>, vector<1x32xf32>
    %17 = vector.broadcast %16 : vector<1x32xf32> to vector<16x32xf32>
    %18 = arith.addf %15, %17 : vector<16x32xf32>
    %19 = arith.addf %18, %7 : vector<16x32xf32>
    %cst_16 = arith.constant 0.000000e+00 : f32
    %20 = vector.broadcast %cst_16 : f32 to vector<16x32xf32>
    %21 = arith.cmpf oge, %19, %20 : vector<16x32xf32>
    %cst_17 = arith.constant 2.000000e-01 : f32
    %22 = vector.broadcast %cst_17 : f32 to vector<16x32xf32>
    %23 = arith.mulf %22, %19 : vector<16x32xf32>
    %24 = arith.select %21, %19, %23 : vector<16x32xi1>, vector<16x32xf32>
    %c0_18 = arith.constant 0 : index
    %c0_19 = arith.constant 0 : index
    %25 = vector.load %arg10[%c0_18, %c0_19] : memref<32x32xf32, #tpu.memory_space<vmem>>, vector<32x32xf32>
    %cst_20 = arith.constant dense<0.000000e+00> : vector<16x32xf32>
    %26 = tpu.matmul %24, %25, %cst_20 {dimension_numbers = #tpu.dot_dimension_numbers<[1], [0], [0], [1], [0, 0, 1, 1], [], []>} : vector<16x32xf32>, vector<32x32xf32>, vector<16x32xf32> -> vector<16x32xf32>
    %cst_21 = arith.constant dense<0.000000e+00> : vector<16x32xf32>
    %27 = tpu.matmul %0, %26, %cst_21 {dimension_numbers = #tpu.dot_dimension_numbers<[1], [0], [0], [1], [0, 0, 1, 1], [], []>} : vector<16x16xf32>, vector<16x32xf32>, vector<16x32xf32> -> vector<16x32xf32>
    %c0_22 = arith.constant 0 : index
    %c0_23 = arith.constant 0 : index
    %28 = vector.load %arg11[%c0_22, %c0_23] : memref<1x32xf32, #tpu.memory_space<vmem>>, vector<1x32xf32>
    %29 = vector.broadcast %28 : vector<1x32xf32> to vector<16x32xf32>
    %30 = arith.addf %27, %29 : vector<16x32xf32>
    %31 = arith.addf %30, %19 : vector<16x32xf32>
    %cst_24 = arith.constant 0.000000e+00 : f32
    %32 = vector.broadcast %cst_24 : f32 to vector<16x32xf32>
    %33 = arith.cmpf oge, %31, %32 : vector<16x32xf32>
    %cst_25 = arith.constant 2.000000e-01 : f32
    %34 = vector.broadcast %cst_25 : f32 to vector<16x32xf32>
    %35 = arith.mulf %34, %31 : vector<16x32xf32>
    %36 = arith.select %33, %31, %35 : vector<16x32xi1>, vector<16x32xf32>
    %c0_26 = arith.constant 0 : index
    %c0_27 = arith.constant 0 : index
    %37 = vector.load %arg12[%c0_26, %c0_27] : memref<32x32xf32, #tpu.memory_space<vmem>>, vector<32x32xf32>
    %cst_28 = arith.constant dense<0.000000e+00> : vector<16x32xf32>
    %38 = tpu.matmul %36, %37, %cst_28 {dimension_numbers = #tpu.dot_dimension_numbers<[1], [0], [0], [1], [0, 0, 1, 1], [], []>} : vector<16x32xf32>, vector<32x32xf32>, vector<16x32xf32> -> vector<16x32xf32>
    %cst_29 = arith.constant dense<0.000000e+00> : vector<16x32xf32>
    %39 = tpu.matmul %0, %38, %cst_29 {dimension_numbers = #tpu.dot_dimension_numbers<[1], [0], [0], [1], [0, 0, 1, 1], [], []>} : vector<16x16xf32>, vector<16x32xf32>, vector<16x32xf32> -> vector<16x32xf32>
    %c0_30 = arith.constant 0 : index
    %c0_31 = arith.constant 0 : index
    %40 = vector.load %arg13[%c0_30, %c0_31] : memref<1x32xf32, #tpu.memory_space<vmem>>, vector<1x32xf32>
    %41 = vector.broadcast %40 : vector<1x32xf32> to vector<16x32xf32>
    %42 = arith.addf %39, %41 : vector<16x32xf32>
    %43 = arith.addf %42, %31 : vector<16x32xf32>
    %44 = vector.extract_strided_slice %43 {offsets = [0, 0], sizes = [8, 32], strides = [1, 1]} : vector<16x32xf32> to vector<8x32xf32>
    %cst_32 = arith.constant dense<0.000000e+00> : vector<32xf32>
    %45 = vector.multi_reduction <add>, %44, %cst_32 [0] : vector<8x32xf32> to vector<32xf32>
    %46 = vector.shape_cast %45 : vector<32xf32> to vector<1x32xf32>
    %cst_33 = arith.constant 8.000000e+00 : f32
    %47 = vector.broadcast %cst_33 : f32 to vector<1x32xf32>
    %48 = arith.divf %46, %47 : vector<1x32xf32>
    %49 = vector.extract_strided_slice %43 {offsets = [8, 0], sizes = [8, 32], strides = [1, 1]} : vector<16x32xf32> to vector<8x32xf32>
    %cst_34 = arith.constant dense<0.000000e+00> : vector<32xf32>
    %50 = vector.multi_reduction <add>, %49, %cst_34 [0] : vector<8x32xf32> to vector<32xf32>
    %51 = vector.shape_cast %50 : vector<32xf32> to vector<1x32xf32>
    %cst_35 = arith.constant 8.000000e+00 : f32
    %52 = vector.broadcast %cst_35 : f32 to vector<1x32xf32>
    %53 = arith.divf %51, %52 : vector<1x32xf32>
    %54 = tpu.concatenate %48, %53 in 0 : vector<1x32xf32>, vector<1x32xf32> -> vector<2x32xf32>
    %55 = vector.extract_strided_slice %54 {offsets = [0, 0], sizes = [2, 16], strides = [1, 1]} : vector<2x32xf32> to vector<2x16xf32>
    %c0_36 = arith.constant 0 : index
    %c0_37 = arith.constant 0 : index
    %56 = vector.load %arg2[%c0_36, %c0_37] : memref<16x16xf32, #tpu.memory_space<vmem>>, vector<16x16xf32>
    %c0_38 = arith.constant 0 : index
    %c0_39 = arith.constant 0 : index
    %57 = vector.load %arg3[%c0_38, %c0_39] : memref<16x6xf32, #tpu.memory_space<vmem>>, vector<16x6xf32>
    %c0_40 = arith.constant 0 : index
    %c0_41 = arith.constant 0 : index
    %58 = vector.load %arg14[%c0_40, %c0_41] : memref<6x32xf32, #tpu.memory_space<vmem>>, vector<6x32xf32>
    %cst_42 = arith.constant dense<0.000000e+00> : vector<16x32xf32>
    %59 = tpu.matmul %57, %58, %cst_42 {dimension_numbers = #tpu.dot_dimension_numbers<[1], [0], [0], [1], [0, 0, 1, 1], [], []>} : vector<16x6xf32>, vector<6x32xf32>, vector<16x32xf32> -> vector<16x32xf32>
    %cst_43 = arith.constant dense<0.000000e+00> : vector<16x32xf32>
    %60 = tpu.matmul %56, %59, %cst_43 {dimension_numbers = #tpu.dot_dimension_numbers<[1], [0], [0], [1], [0, 0, 1, 1], [], []>} : vector<16x16xf32>, vector<16x32xf32>, vector<16x32xf32> -> vector<16x32xf32>
    %c0_44 = arith.constant 0 : index
    %c0_45 = arith.constant 0 : index
    %61 = vector.load %arg15[%c0_44, %c0_45] : memref<1x32xf32, #tpu.memory_space<vmem>>, vector<1x32xf32>
    %62 = vector.broadcast %61 : vector<1x32xf32> to vector<16x32xf32>
    %63 = arith.addf %60, %62 : vector<16x32xf32>
    %cst_46 = arith.constant 0.000000e+00 : f32
    %64 = vector.broadcast %cst_46 : f32 to vector<16x32xf32>
    %65 = arith.cmpf oge, %63, %64 : vector<16x32xf32>
    %cst_47 = arith.constant 2.000000e-01 : f32
    %66 = vector.broadcast %cst_47 : f32 to vector<16x32xf32>
    %67 = arith.mulf %66, %63 : vector<16x32xf32>
    %68 = arith.select %65, %63, %67 : vector<16x32xi1>, vector<16x32xf32>
    %c0_48 = arith.constant 0 : index
    %c0_49 = arith.constant 0 : index
    %69 = vector.load %arg16[%c0_48, %c0_49] : memref<32x32xf32, #tpu.memory_space<vmem>>, vector<32x32xf32>
    %cst_50 = arith.constant dense<0.000000e+00> : vector<16x32xf32>
    %70 = tpu.matmul %68, %69, %cst_50 {dimension_numbers = #tpu.dot_dimension_numbers<[1], [0], [0], [1], [0, 0, 1, 1], [], []>} : vector<16x32xf32>, vector<32x32xf32>, vector<16x32xf32> -> vector<16x32xf32>
    %cst_51 = arith.constant dense<0.000000e+00> : vector<16x32xf32>
    %71 = tpu.matmul %56, %70, %cst_51 {dimension_numbers = #tpu.dot_dimension_numbers<[1], [0], [0], [1], [0, 0, 1, 1], [], []>} : vector<16x16xf32>, vector<16x32xf32>, vector<16x32xf32> -> vector<16x32xf32>
    %c0_52 = arith.constant 0 : index
    %c0_53 = arith.constant 0 : index
    %72 = vector.load %arg17[%c0_52, %c0_53] : memref<1x32xf32, #tpu.memory_space<vmem>>, vector<1x32xf32>
    %73 = vector.broadcast %72 : vector<1x32xf32> to vector<16x32xf32>
    %74 = arith.addf %71, %73 : vector<16x32xf32>
    %75 = arith.addf %74, %63 : vector<16x32xf32>
    %cst_54 = arith.constant 0.000000e+00 : f32
    %76 = vector.broadcast %cst_54 : f32 to vector<16x32xf32>
    %77 = arith.cmpf oge, %75, %76 : vector<16x32xf32>
    %cst_55 = arith.constant 2.000000e-01 : f32
    %78 = vector.broadcast %cst_55 : f32 to vector<16x32xf32>
    %79 = arith.mulf %78, %75 : vector<16x32xf32>
    %80 = arith.select %77, %75, %79 : vector<16x32xi1>, vector<16x32xf32>
    %c0_56 = arith.constant 0 : index
    %c0_57 = arith.constant 0 : index
    %81 = vector.load %arg18[%c0_56, %c0_57] : memref<32x32xf32, #tpu.memory_space<vmem>>, vector<32x32xf32>
    %cst_58 = arith.constant dense<0.000000e+00> : vector<16x32xf32>
    %82 = tpu.matmul %80, %81, %cst_58 {dimension_numbers = #tpu.dot_dimension_numbers<[1], [0], [0], [1], [0, 0, 1, 1], [], []>} : vector<16x32xf32>, vector<32x32xf32>, vector<16x32xf32> -> vector<16x32xf32>
    %cst_59 = arith.constant dense<0.000000e+00> : vector<16x32xf32>
    %83 = tpu.matmul %56, %82, %cst_59 {dimension_numbers = #tpu.dot_dimension_numbers<[1], [0], [0], [1], [0, 0, 1, 1], [], []>} : vector<16x16xf32>, vector<16x32xf32>, vector<16x32xf32> -> vector<16x32xf32>
    %c0_60 = arith.constant 0 : index
    %c0_61 = arith.constant 0 : index
    %84 = vector.load %arg19[%c0_60, %c0_61] : memref<1x32xf32, #tpu.memory_space<vmem>>, vector<1x32xf32>
    %85 = vector.broadcast %84 : vector<1x32xf32> to vector<16x32xf32>
    %86 = arith.addf %83, %85 : vector<16x32xf32>
    %87 = arith.addf %86, %75 : vector<16x32xf32>
    %cst_62 = arith.constant 0.000000e+00 : f32
    %88 = vector.broadcast %cst_62 : f32 to vector<16x32xf32>
    %89 = arith.cmpf oge, %87, %88 : vector<16x32xf32>
    %cst_63 = arith.constant 2.000000e-01 : f32
    %90 = vector.broadcast %cst_63 : f32 to vector<16x32xf32>
    %91 = arith.mulf %90, %87 : vector<16x32xf32>
    %92 = arith.select %89, %87, %91 : vector<16x32xi1>, vector<16x32xf32>
    %c0_64 = arith.constant 0 : index
    %c0_65 = arith.constant 0 : index
    %93 = vector.load %arg20[%c0_64, %c0_65] : memref<32x32xf32, #tpu.memory_space<vmem>>, vector<32x32xf32>
    %cst_66 = arith.constant dense<0.000000e+00> : vector<16x32xf32>
    %94 = tpu.matmul %92, %93, %cst_66 {dimension_numbers = #tpu.dot_dimension_numbers<[1], [0], [0], [1], [0, 0, 1, 1], [], []>} : vector<16x32xf32>, vector<32x32xf32>, vector<16x32xf32> -> vector<16x32xf32>
    %cst_67 = arith.constant dense<0.000000e+00> : vector<16x32xf32>
    %95 = tpu.matmul %56, %94, %cst_67 {dimension_numbers = #tpu.dot_dimension_numbers<[1], [0], [0], [1], [0, 0, 1, 1], [], []>} : vector<16x16xf32>, vector<16x32xf32>, vector<16x32xf32> -> vector<16x32xf32>
    %c0_68 = arith.constant 0 : index
    %c0_69 = arith.constant 0 : index
    %96 = vector.load %arg21[%c0_68, %c0_69] : memref<1x32xf32, #tpu.memory_space<vmem>>, vector<1x32xf32>
    %97 = vector.broadcast %96 : vector<1x32xf32> to vector<16x32xf32>
    %98 = arith.addf %95, %97 : vector<16x32xf32>
    %99 = arith.addf %98, %87 : vector<16x32xf32>
    %100 = vector.extract_strided_slice %99 {offsets = [0, 0], sizes = [8, 32], strides = [1, 1]} : vector<16x32xf32> to vector<8x32xf32>
    %cst_70 = arith.constant dense<0.000000e+00> : vector<32xf32>
    %101 = vector.multi_reduction <add>, %100, %cst_70 [0] : vector<8x32xf32> to vector<32xf32>
    %102 = vector.shape_cast %101 : vector<32xf32> to vector<1x32xf32>
    %cst_71 = arith.constant 8.000000e+00 : f32
    %103 = vector.broadcast %cst_71 : f32 to vector<1x32xf32>
    %104 = arith.divf %102, %103 : vector<1x32xf32>
    %105 = vector.extract_strided_slice %99 {offsets = [8, 0], sizes = [8, 32], strides = [1, 1]} : vector<16x32xf32> to vector<8x32xf32>
    %cst_72 = arith.constant dense<0.000000e+00> : vector<32xf32>
    %106 = vector.multi_reduction <add>, %105, %cst_72 [0] : vector<8x32xf32> to vector<32xf32>
    %107 = vector.shape_cast %106 : vector<32xf32> to vector<1x32xf32>
    %cst_73 = arith.constant 8.000000e+00 : f32
    %108 = vector.broadcast %cst_73 : f32 to vector<1x32xf32>
    %109 = arith.divf %107, %108 : vector<1x32xf32>
    %110 = tpu.concatenate %104, %109 in 0 : vector<1x32xf32>, vector<1x32xf32> -> vector<2x32xf32>
    %111 = vector.extract_strided_slice %110 {offsets = [0, 0], sizes = [2, 16], strides = [1, 1]} : vector<2x32xf32> to vector<2x16xf32>
    %c0_74 = arith.constant 0 : index
    %c0_75 = arith.constant 0 : index
    %112 = vector.load %arg4[%c0_74, %c0_75] : memref<2x8xf32, #tpu.memory_space<vmem>>, vector<2x8xf32>
    %113 = tpu.concatenate %55, %111, %112 in 1 : vector<2x16xf32>, vector<2x16xf32>, vector<2x8xf32> -> vector<2x40xf32>
    %c0_76 = arith.constant 0 : index
    %c0_77 = arith.constant 0 : index
    %114 = vector.load %arg22[%c0_76, %c0_77] : memref<40x64xf32, #tpu.memory_space<vmem>>, vector<40x64xf32>
    %cst_78 = arith.constant dense<0.000000e+00> : vector<2x64xf32>
    %115 = tpu.matmul %113, %114, %cst_78 {dimension_numbers = #tpu.dot_dimension_numbers<[1], [0], [0], [1], [0, 0, 1, 1], [], []>} : vector<2x40xf32>, vector<40x64xf32>, vector<2x64xf32> -> vector<2x64xf32>
    %116 = math.tanh %115 : vector<2x64xf32>
    %c0_79 = arith.constant 0 : index
    %c0_80 = arith.constant 0 : index
    %117 = vector.load %arg23[%c0_79, %c0_80] : memref<64x32xf32, #tpu.memory_space<vmem>>, vector<64x32xf32>
    %cst_81 = arith.constant dense<0.000000e+00> : vector<2x32xf32>
    %118 = tpu.matmul %116, %117, %cst_81 {dimension_numbers = #tpu.dot_dimension_numbers<[1], [0], [0], [1], [0, 0, 1, 1], [], []>} : vector<2x64xf32>, vector<64x32xf32>, vector<2x32xf32> -> vector<2x32xf32>
    %119 = math.tanh %118 : vector<2x32xf32>
    %c0_82 = arith.constant 0 : index
    %c0_83 = arith.constant 0 : index
    %120 = vector.load %arg24[%c0_82, %c0_83] : memref<32x1xf32, #tpu.memory_space<vmem>>, vector<32x1xf32>
    %cst_84 = arith.constant dense<0.000000e+00> : vector<2x1xf32>
    %121 = tpu.matmul %119, %120, %cst_84 {dimension_numbers = #tpu.dot_dimension_numbers<[1], [0], [0], [1], [0, 0, 1, 1], [], []>} : vector<2x32xf32>, vector<32x1xf32>, vector<2x1xf32> -> vector<2x1xf32>
    %c0_85 = arith.constant 0 : index
    %c0_86 = arith.constant 0 : index
    %122 = vector.load %arg25[%c0_85, %c0_86] : memref<1x1xf32, #tpu.memory_space<vmem>>, vector<1x1xf32>
    %123 = vector.broadcast %122 : vector<1x1xf32> to vector<2x1xf32>
    %124 = arith.addf %121, %123 : vector<2x1xf32>
    %c0_87 = arith.constant 0 : index
    %c0_88 = arith.constant 0 : index
    %125 = vector.load %arg26[%c0_87, %c0_88] : memref<40x32xf32, #tpu.memory_space<vmem>>, vector<40x32xf32>
    %cst_89 = arith.constant dense<0.000000e+00> : vector<2x32xf32>
    %126 = tpu.matmul %113, %125, %cst_89 {dimension_numbers = #tpu.dot_dimension_numbers<[1], [0], [0], [1], [0, 0, 1, 1], [], []>} : vector<2x40xf32>, vector<40x32xf32>, vector<2x32xf32> -> vector<2x32xf32>
    %c0_90 = arith.constant 0 : index
    %c0_91 = arith.constant 0 : index
    %127 = vector.load %arg27[%c0_90, %c0_91] : memref<1x32xf32, #tpu.memory_space<vmem>>, vector<1x32xf32>
    %128 = vector.broadcast %127 : vector<1x32xf32> to vector<2x32xf32>
    %129 = arith.addf %126, %128 : vector<2x32xf32>
    %cst_92 = arith.constant 0.000000e+00 : f32
    %130 = vector.broadcast %cst_92 : f32 to vector<2x32xf32>
    %131 = arith.cmpf oge, %129, %130 : vector<2x32xf32>
    %cst_93 = arith.constant 2.000000e-01 : f32
    %132 = vector.broadcast %cst_93 : f32 to vector<2x32xf32>
    %133 = arith.mulf %132, %129 : vector<2x32xf32>
    %134 = arith.select %131, %129, %133 : vector<2x32xi1>, vector<2x32xf32>
    %c0_94 = arith.constant 0 : index
    %c0_95 = arith.constant 0 : index
    %135 = vector.load %arg28[%c0_94, %c0_95] : memref<32x32xf32, #tpu.memory_space<vmem>>, vector<32x32xf32>
    %cst_96 = arith.constant dense<0.000000e+00> : vector<2x32xf32>
    %136 = tpu.matmul %134, %135, %cst_96 {dimension_numbers = #tpu.dot_dimension_numbers<[1], [0], [0], [1], [0, 0, 1, 1], [], []>} : vector<2x32xf32>, vector<32x32xf32>, vector<2x32xf32> -> vector<2x32xf32>
    %c0_97 = arith.constant 0 : index
    %c0_98 = arith.constant 0 : index
    %137 = vector.load %arg29[%c0_97, %c0_98] : memref<1x32xf32, #tpu.memory_space<vmem>>, vector<1x32xf32>
    %138 = vector.broadcast %137 : vector<1x32xf32> to vector<2x32xf32>
    %139 = arith.addf %136, %138 : vector<2x32xf32>
    %cst_99 = arith.constant 0.000000e+00 : f32
    %140 = vector.broadcast %cst_99 : f32 to vector<2x32xf32>
    %141 = arith.cmpf oge, %139, %140 : vector<2x32xf32>
    %cst_100 = arith.constant 2.000000e-01 : f32
    %142 = vector.broadcast %cst_100 : f32 to vector<2x32xf32>
    %143 = arith.mulf %142, %139 : vector<2x32xf32>
    %144 = arith.select %141, %139, %143 : vector<2x32xi1>, vector<2x32xf32>
    %c0_101 = arith.constant 0 : index
    %c0_102 = arith.constant 0 : index
    %145 = vector.load %arg30[%c0_101, %c0_102] : memref<32x32xf32, #tpu.memory_space<vmem>>, vector<32x32xf32>
    %cst_103 = arith.constant dense<0.000000e+00> : vector<2x32xf32>
    %146 = tpu.matmul %144, %145, %cst_103 {dimension_numbers = #tpu.dot_dimension_numbers<[1], [0], [0], [1], [0, 0, 1, 1], [], []>} : vector<2x32xf32>, vector<32x32xf32>, vector<2x32xf32> -> vector<2x32xf32>
    %c0_104 = arith.constant 0 : index
    %c0_105 = arith.constant 0 : index
    %147 = vector.load %arg31[%c0_104, %c0_105] : memref<1x32xf32, #tpu.memory_space<vmem>>, vector<1x32xf32>
    %148 = vector.broadcast %147 : vector<1x32xf32> to vector<2x32xf32>
    %149 = arith.addf %146, %148 : vector<2x32xf32>
    %cst_106 = arith.constant 0.000000e+00 : f32
    %150 = vector.broadcast %cst_106 : f32 to vector<2x32xf32>
    %151 = arith.cmpf oge, %149, %150 : vector<2x32xf32>
    %cst_107 = arith.constant 2.000000e-01 : f32
    %152 = vector.broadcast %cst_107 : f32 to vector<2x32xf32>
    %153 = arith.mulf %152, %149 : vector<2x32xf32>
    %154 = arith.select %151, %149, %153 : vector<2x32xi1>, vector<2x32xf32>
    %c0_108 = arith.constant 0 : index
    %c0_109 = arith.constant 0 : index
    %155 = vector.load %arg32[%c0_108, %c0_109] : memref<32x11xf32, #tpu.memory_space<vmem>>, vector<32x11xf32>
    %cst_110 = arith.constant dense<0.000000e+00> : vector<2x11xf32>
    %156 = tpu.matmul %154, %155, %cst_110 {dimension_numbers = #tpu.dot_dimension_numbers<[1], [0], [0], [1], [0, 0, 1, 1], [], []>} : vector<2x32xf32>, vector<32x11xf32>, vector<2x11xf32> -> vector<2x11xf32>
    %c0_111 = arith.constant 0 : index
    %c0_112 = arith.constant 0 : index
    %157 = vector.load %arg33[%c0_111, %c0_112] : memref<1x11xf32, #tpu.memory_space<vmem>>, vector<1x11xf32>
    %158 = vector.broadcast %157 : vector<1x11xf32> to vector<2x11xf32>
    %159 = arith.addf %156, %158 : vector<2x11xf32>
    %c0_113 = arith.constant 0 : index
    %c0_114 = arith.constant 0 : index
    %160 = vector.load %arg5[%c0_113, %c0_114] : memref<2x11xf32, #tpu.memory_space<vmem>>, vector<2x11xf32>
    %cst_115 = arith.constant 5.000000e-01 : f32
    %161 = vector.broadcast %cst_115 : f32 to vector<2x11xf32>
    %162 = arith.cmpf ogt, %160, %161 : vector<2x11xf32>
    %cst_116 = arith.constant 0xFF800000 : f32
    %163 = vector.broadcast %cst_116 : f32 to vector<2x11xf32>
    %164 = arith.select %162, %163, %159 : vector<2x11xi1>, vector<2x11xf32>
    %cst_117 = arith.constant dense<0xFF800000> : vector<2xf32>
    %165 = vector.multi_reduction <maximumf>, %164, %cst_117 [1] : vector<2x11xf32> to vector<2xf32>
    %166 = vector.shape_cast %165 : vector<2xf32> to vector<2x1xf32>
    %167 = vector.broadcast %166 : vector<2x1xf32> to vector<2x11xf32>
    %168 = arith.subf %164, %167 : vector<2x11xf32>
    %169 = math.exp %168 : vector<2x11xf32>
    %cst_118 = arith.constant dense<0.000000e+00> : vector<2xf32>
    %170 = vector.multi_reduction <add>, %169, %cst_118 [1] : vector<2x11xf32> to vector<2xf32>
    %171 = vector.shape_cast %170 : vector<2xf32> to vector<2x1xf32>
    %172 = math.log %171 : vector<2x1xf32>
    %173 = vector.broadcast %172 : vector<2x1xf32> to vector<2x11xf32>
    %174 = arith.subf %168, %173 : vector<2x11xf32>
    %cst_119 = arith.constant 0.000000e+00 : f32
    %175 = vector.broadcast %cst_119 : f32 to vector<2x76xf32>
    %176 = tpu.concatenate %113, %124, %174, %175 in 1 : vector<2x40xf32>, vector<2x1xf32>, vector<2x11xf32>, vector<2x76xf32> -> vector<2x128xf32>
    %c0_120 = arith.constant 0 : index
    %c0_121 = arith.constant 0 : index
    %177 = vector.load %arg34[%c0_120, %c0_121] : memref<2x128xf32, #tpu.memory_space<vmem>>, vector<2x128xf32>
    tpu.vector_store %arg34[%c0_120, %c0_121], %176 {strides = array<i32>} : memref<2x128xf32, #tpu.memory_space<vmem>>, vector<2x128xf32>,
    return
  }
}

</mosaic_0001>

<llo_original>
// kernel: gnn_feature_extractor_forward.1
$region0: #{gnn_feature_extractor_forward.1}
  #allocation0 [shape = 'u32[]', space=smem, size = 0x4, offset = 0x4, fixed_abs, tag = 'smem constant byte address 0x4 - core index']
  #allocation1 [shape = 'u32[144,128]{1,0:T(1,128)}', space=vmem, size = 0x12000, scoped, tag = 'internal scratch']
  #allocation2 [shape = 'f32[1,1]{1,0:T(1,128)S(1)}', space=vmem, size = 0x200, scoped, tag = 'scoped memory for gnn_feature_extractor_forward.1']
  %s0 = inlined_call_operand.smem [shape: u32[35], index: -1, kind: input, shape index: {}]
  %s1 = sld [smem:[%s0]]
  %s2 = scalar_lea.smem %s0, 1
  %s3 = sld [smem:[%s2]]
  %s4 = scalar_lea.smem %s0, 2
  %s5 = sld [smem:[%s4]]
  %s6 = scalar_lea.smem %s0, 3
  %s7 = sld [smem:[%s6]]
  %s8 = scalar_lea.smem %s0, 4
  %s9 = sld [smem:[%s8]]
  %s10 = scalar_lea.smem %s0, 5
  %s11 = sld [smem:[%s10]]
  %s12 = scalar_lea.smem %s0, 6
  %s13 = sld [smem:[%s12]]
  %s14 = scalar_lea.smem %s0, 7
  %s15 = sld [smem:[%s14]]
  %s16 = scalar_lea.smem %s0, 8
  %s17 = sld [smem:[%s16]]
  %s18 = scalar_lea.smem %s0, 9
  %s19 = sld [smem:[%s18]]
  %s20 = scalar_lea.smem %s0, 10
  %s21 = sld [smem:[%s20]]
  %s22 = scalar_lea.smem %s0, 11
  %s23 = sld [smem:[%s22]]
  %s24 = scalar_lea.smem %s0, 12
  %s25 = sld [smem:[%s24]]
  %s26 = scalar_lea.smem %s0, 13
  %s27 = sld [smem:[%s26]]
  %s28 = scalar_lea.smem %s0, 14
  %s29 = sld [smem:[%s28]]
  %s30 = scalar_lea.smem %s0, 15
  %s31 = sld [smem:[%s30]]
  %s32 = scalar_lea.smem %s0, 16
  %s33 = sld [smem:[%s32]]
  %s34 = scalar_lea.smem %s0, 17
  %s35 = sld [smem:[%s34]]
  %s36 = scalar_lea.smem %s0, 18
  %s37 = sld [smem:[%s36]]
  %s38 = scalar_lea.smem %s0, 19
  %s39 = sld [smem:[%s38]]
  %s40 = scalar_lea.smem %s0, 20
  %s41 = sld [smem:[%s40]]
  %s42 = scalar_lea.smem %s0, 21
  %s43 = sld [smem:[%s42]]
  %s44 = scalar_lea.smem %s0, 22
  %s45 = sld [smem:[%s44]]
  %s46 = scalar_lea.smem %s0, 23
  %s47 = sld [smem:[%s46]]
  %s48 = scalar_lea.smem %s0, 24
  %s49 = sld [smem:[%s48]]
  %s50 = scalar_lea.smem %s0, 25
  %s51 = sld [smem:[%s50]]
  %s52 = scalar_lea.smem %s0, 26
  %s53 = sld [smem:[%s52]]
  %s54 = scalar_lea.smem %s0, 27
  %s55 = sld [smem:[%s54]]
  %s56 = scalar_lea.smem %s0, 28
  %s57 = sld [smem:[%s56]]
  %s58 = scalar_lea.smem %s0, 29
  %s59 = sld [smem:[%s58]]
  %s60 = scalar_lea.smem %s0, 30
  %s61 = sld [smem:[%s60]]
  %s62 = scalar_lea.smem %s0, 31
  %s63 = sld [smem:[%s62]]
  %s64 = scalar_lea.smem %s0, 32
  %s65 = sld [smem:[%s64]]
  %s66 = scalar_lea.smem %s0, 33
  %s67 = sld [smem:[%s66]]
  %s68 = scalar_lea.smem %s0, 34
  %s69 = sld [smem:[%s68]]
  %s70 = sld [smem:[#allocation0]]
  $region198: #{gnn_feature_extractor_forward.1} parent=0
    _
  %s72 = ssub.s32 1, %s70
  %s73 = scalar_select 0, %s72, %s70
  %v74 = vstv %s51
  %75 = vst [vmem:[#allocation2] sm:$0x1] %v74
  $region1: #{gnn_feature_extractor_forward.1} parent=0
    #allocation3 [shape = 'u8[8192]{0}', space=vmem, size = 0x2000, scoped, tag = 'input window, operand 0, single buffered']
    #allocation4 [shape = 's32[1]{0}', space=sflag, size = 0x4, scoped, tag = 'scoped memory for gnn_feature_extractor_forward.1']
    #allocation5 [shape = 'u8[8192]{0}', space=vmem, size = 0x2000, scoped, tag = 'input window, operand 2, single buffered']
    #allocation6 [shape = 's32[1]{0}', space=sflag, size = 0x4, scoped, tag = 'scoped memory for gnn_feature_extractor_forward.1']
    #allocation7 [shape = 'u8[1024]{0}', space=vmem, size = 0x400, scoped, tag = 'input window, operand 4, single buffered']
    #allocation8 [shape = 'u8[4096]{0}', space=vmem, size = 0x1000, scoped, tag = 'input window, operand 14, single buffered']
    #allocation9 [shape = 's32[1]{0}', space=sflag, size = 0x4, scoped, tag = 'scoped memory for gnn_feature_extractor_forward.1']
    #allocation10 [shape = 'u8[512]{0}', space=vmem, size = 0x400, scoped, tag = 'input window, operand 15, single buffered']
    #allocation11 [shape = 'u8[512]{0}', space=vmem, size = 0x400, scoped, tag = 'input window, operand 17, single buffered']
    #allocation12 [shape = 's32[1]{0}', space=sflag, size = 0x4, scoped, tag = 'scoped memory for gnn_feature_extractor_forward.1']
    #allocation13 [shape = 'u8[512]{0}', space=vmem, size = 0x400, scoped, tag = 'input window, operand 19, single buffered']
    #allocation14 [shape = 'u8[512]{0}', space=vmem, size = 0x400, scoped, tag = 'input window, operand 21, single buffered']
    #allocation15 [shape = 's32[1]{0}', space=sflag, size = 0x4, scoped, tag = 'scoped memory for gnn_feature_extractor_forward.1']
    #allocation16 [shape = 'u8[512]{0}', space=vmem, size = 0x400, scoped, tag = 'input window, operand 27, single buffered']
    #allocation17 [shape = 'u8[512]{0}', space=vmem, size = 0x400, scoped, tag = 'input window, operand 29, single buffered']
    #allocation18 [shape = 's32[1]{0}', space=sflag, size = 0x4, scoped, tag = 'scoped memory for gnn_feature_extractor_forward.1']
    #allocation19 [shape = 'u8[16384]{0}', space=vmem, size = 0x4000, scoped, tag = 'input window, operand 30, single buffered']
    #allocation20 [shape = 'u8[512]{0}', space=vmem, size = 0x400, scoped, tag = 'input window, operand 31, single buffered']
    #allocation21 [shape = 's32[1]{0}', space=sflag, size = 0x4, scoped, tag = 'scoped memory for gnn_feature_extractor_forward.1']
    #allocation22 [shape = 'u8[512]{0}', space=vmem, size = 0x400, scoped, tag = 'input window, operand 33, single buffered']
    %76 = vsyncpa [#allocation4], 0
    %77 = vsyncpa [#allocation6], 0
    %78 = vsyncpa [#allocation9], 0
    %79 = vsyncpa [#allocation12], 0
    %80 = vsyncpa [#allocation15], 0
    %81 = vsyncpa [#allocation18], 0
    %82 = vsyncpa [#allocation21], 0
    // Predicated region
    $region2: #{gnn_feature_extractor_forward.1} parent=1 // pred_check
      _
    $region3: #{gnn_feature_extractor_forward.1} parent=1 // pred_check_branch
      %84 = sbr.rel (0) target = $region5
    $region4: #{gnn_feature_extractor_forward.1} parent=1 // pred_region
      %s86 = ssub.s32 256, 256
      %87 = vsyncadd [#allocation4], %s86
      %s88 = sshll.u32 [#allocation3], 4
      %s89 = int_to_ptr.vmem [resolvable:$true] %s88
      %94 = dma.hbm_to_vmem [thread:$0]  %s1, 256, %s89, [#allocation4], 128, 128, 8
    $region5: #{gnn_feature_extractor_forward.1} parent=1 // pred_fallthru
      _
    // Predicated region
    $region6: #{gnn_feature_extractor_forward.1} parent=1 // pred_check
      _
    $region7: #{gnn_feature_extractor_forward.1} parent=1 // pred_check_branch
      %96 = sbr.rel (0) target = $region9
    $region8: #{gnn_feature_extractor_forward.1} parent=1 // pred_region
      _
    $region9: #{gnn_feature_extractor_forward.1} parent=1 // pred_fallthru
      _
    // Predicated region
    $region10: #{gnn_feature_extractor_forward.1} parent=1 // pred_check
      _
    $region11: #{gnn_feature_extractor_forward.1} parent=1 // pred_check_branch
      %98 = sbr.rel (0) target = $region13
    $region12: #{gnn_feature_extractor_forward.1} parent=1 // pred_region
      %s100 = ssub.s32 256, 256
      %101 = vsyncadd [#allocation6], %s100
      %s102 = sshll.u32 [#allocation5], 4
      %s103 = int_to_ptr.vmem [resolvable:$true] %s102
      %108 = dma.hbm_to_vmem [thread:$0]  %s5, 256, %s103, [#allocation6], 128, 128, 8
    $region13: #{gnn_feature_extractor_forward.1} parent=1 // pred_fallthru
      _
    // Predicated region
    $region14: #{gnn_feature_extractor_forward.1} parent=1 // pred_check
      _
    $region15: #{gnn_feature_extractor_forward.1} parent=1 // pred_check_branch
      %110 = sbr.rel (0) target = $region17
    $region16: #{gnn_feature_extractor_forward.1} parent=1 // pred_region
      _
    $region17: #{gnn_feature_extractor_forward.1} parent=1 // pred_fallthru
      _
    // Predicated region
    $region18: #{gnn_feature_extractor_forward.1} parent=1 // pred_check
      _
    $region19: #{gnn_feature_extractor_forward.1} parent=1 // pred_check_branch
      %112 = sbr.rel (0) target = $region21
    $region20: #{gnn_feature_extractor_forward.1} parent=1 // pred_region
      %s114 = ssub.s32 32, 32
      %115 = vsyncadd [#allocation6], %s114
      %s117 = sshll.u32 [#allocation7], 4
      %s118 = int_to_ptr.vmem [resolvable:$true] %s117
      %120 = dma.hbm_to_vmem [thread:$0]  %s9, 32, %s118, [#allocation6]
    $region21: #{gnn_feature_extractor_forward.1} parent=1 // pred_fallthru
      _
    // Predicated region
    $region22: #{gnn_feature_extractor_forward.1} parent=1 // pred_check
      _
    $region23: #{gnn_feature_extractor_forward.1} parent=1 // pred_check_branch
      %122 = sbr.rel (0) target = $region25
    $region24: #{gnn_feature_extractor_forward.1} parent=1 // pred_region
      _
    $region25: #{gnn_feature_extractor_forward.1} parent=1 // pred_fallthru
      _
    // Predicated region
    $region26: #{gnn_feature_extractor_forward.1} parent=1 // pred_check
      _
    $region27: #{gnn_feature_extractor_forward.1} parent=1 // pred_check_branch
      %124 = sbr.rel (0) target = $region29
    $region28: #{gnn_feature_extractor_forward.1} parent=1 // pred_region
      _
    $region29: #{gnn_feature_extractor_forward.1} parent=1 // pred_fallthru
      _
    // Predicated region
    $region30: #{gnn_feature_extractor_forward.1} parent=1 // pred_check
      _
    $region31: #{gnn_feature_extractor_forward.1} parent=1 // pred_check_branch
      %126 = sbr.rel (0) target = $region33
    $region32: #{gnn_feature_extractor_forward.1} parent=1 // pred_region
      _
    $region33: #{gnn_feature_extractor_forward.1} parent=1 // pred_fallthru
      _
    // Predicated region
    $region34: #{gnn_feature_extractor_forward.1} parent=1 // pred_check
      _
    $region35: #{gnn_feature_extractor_forward.1} parent=1 // pred_check_branch
      %128 = sbr.rel (0) target = $region37
    $region36: #{gnn_feature_extractor_forward.1} parent=1 // pred_region
      _
    $region37: #{gnn_feature_extractor_forward.1} parent=1 // pred_fallthru
      _
    // Predicated region
    $region38: #{gnn_feature_extractor_forward.1} parent=1 // pred_check
      _
    $region39: #{gnn_feature_extractor_forward.1} parent=1 // pred_check_branch
      %130 = sbr.rel (0) target = $region41
    $region40: #{gnn_feature_extractor_forward.1} parent=1 // pred_region
      _
    $region41: #{gnn_feature_extractor_forward.1} parent=1 // pred_fallthru
      _
    // Predicated region
    $region42: #{gnn_feature_extractor_forward.1} parent=1 // pred_check
      _
    $region43: #{gnn_feature_extractor_forward.1} parent=1 // pred_check_branch
      %132 = sbr.rel (0) target = $region45
    $region44: #{gnn_feature_extractor_forward.1} parent=1 // pred_region
      _
    $region45: #{gnn_feature_extractor_forward.1} parent=1 // pred_fallthru
      _
    // Predicated region
    $region46: #{gnn_feature_extractor_forward.1} parent=1 // pred_check
      _
    $region47: #{gnn_feature_extractor_forward.1} parent=1 // pred_check_branch
      %134 = sbr.rel (0) target = $region49
    $region48: #{gnn_feature_extractor_forward.1} parent=1 // pred_region
      _
    $region49: #{gnn_feature_extractor_forward.1} parent=1 // pred_fallthru
      _
    // Predicated region
    $region50: #{gnn_feature_extractor_forward.1} parent=1 // pred_check
      _
    $region51: #{gnn_feature_extractor_forward.1} parent=1 // pred_check_branch
      %136 = sbr.rel (0) target = $region53
    $region52: #{gnn_feature_extractor_forward.1} parent=1 // pred_region
      _
    $region53: #{gnn_feature_extractor_forward.1} parent=1 // pred_fallthru
      _
    // Predicated region
    $region54: #{gnn_feature_extractor_forward.1} parent=1 // pred_check
      _
    $region55: #{gnn_feature_extractor_forward.1} parent=1 // pred_check_branch
      %138 = sbr.rel (0) target = $region57
    $region56: #{gnn_feature_extractor_forward.1} parent=1 // pred_region
      _
    $region57: #{gnn_feature_extractor_forward.1} parent=1 // pred_fallthru
      _
    // Predicated region
    $region58: #{gnn_feature_extractor_forward.1} parent=1 // pred_check
      _
    $region59: #{gnn_feature_extractor_forward.1} parent=1 // pred_check_branch
      %140 = sbr.rel (0) target = $region61
    $region60: #{gnn_feature_extractor_forward.1} parent=1 // pred_region
      %s142 = ssub.s32 128, 128
      %143 = vsyncadd [#allocation9], %s142
      %s145 = sshll.u32 [#allocation8], 4
      %s146 = int_to_ptr.vmem [resolvable:$true] %s145
      %148 = dma.hbm_to_vmem [thread:$0]  %s29, 128, %s146, [#allocation9]
    $region61: #{gnn_feature_extractor_forward.1} parent=1 // pred_fallthru
      _
    // Predicated region
    $region62: #{gnn_feature_extractor_forward.1} parent=1 // pred_check
      _
    $region63: #{gnn_feature_extractor_forward.1} parent=1 // pred_check_branch
      %150 = sbr.rel (0) target = $region65
    $region64: #{gnn_feature_extractor_forward.1} parent=1 // pred_region
      %s152 = ssub.s32 16, 16
      %153 = vsyncadd [#allocation9], %s152
      %s155 = sshll.u32 [#allocation10], 4
      %s156 = int_to_ptr.vmem [resolvable:$true] %s155
      %158 = dma.hbm_to_vmem [thread:$0]  %s31, 16, %s156, [#allocation9]
    $region65: #{gnn_feature_extractor_forward.1} parent=1 // pred_fallthru
      _
    // Predicated region
    $region66: #{gnn_feature_extractor_forward.1} parent=1 // pred_check
      _
    $region67: #{gnn_feature_extractor_forward.1} parent=1 // pred_check_branch
      %160 = sbr.rel (0) target = $region69
    $region68: #{gnn_feature_extractor_forward.1} parent=1 // pred_region
      _
    $region69: #{gnn_feature_extractor_forward.1} parent=1 // pred_fallthru
      _
    // Predicated region
    $region70: #{gnn_feature_extractor_forward.1} parent=1 // pred_check
      _
    $region71: #{gnn_feature_extractor_forward.1} parent=1 // pred_check_branch
      %162 = sbr.rel (0) target = $region73
    $region72: #{gnn_feature_extractor_forward.1} parent=1 // pred_region
      %s164 = ssub.s32 16, 16
      %165 = vsyncadd [#allocation12], %s164
      %s167 = sshll.u32 [#allocation11], 4
      %s168 = int_to_ptr.vmem [resolvable:$true] %s167
      %170 = dma.hbm_to_vmem [thread:$0]  %s35, 16, %s168, [#allocation12]
    $region73: #{gnn_feature_extractor_forward.1} parent=1 // pred_fallthru
      _
    // Predicated region
    $region74: #{gnn_feature_extractor_forward.1} parent=1 // pred_check
      _
    $region75: #{gnn_feature_extractor_forward.1} parent=1 // pred_check_branch
      %172 = sbr.rel (0) target = $region77
    $region76: #{gnn_feature_extractor_forward.1} parent=1 // pred_region
      _
    $region77: #{gnn_feature_extractor_forward.1} parent=1 // pred_fallthru
      _
    // Predicated region
    $region78: #{gnn_feature_extractor_forward.1} parent=1 // pred_check
      _
    $region79: #{gnn_feature_extractor_forward.1} parent=1 // pred_check_branch
      %174 = sbr.rel (0) target = $region81
    $region80: #{gnn_feature_extractor_forward.1} parent=1 // pred_region
      %s176 = ssub.s32 16, 16
      %177 = vsyncadd [#allocation12], %s176
      %s179 = sshll.u32 [#allocation13], 4
      %s180 = int_to_ptr.vmem [resolvable:$true] %s179
      %182 = dma.hbm_to_vmem [thread:$0]  %s39, 16, %s180, [#allocation12]
    $region81: #{gnn_feature_extractor_forward.1} parent=1 // pred_fallthru
      _
    // Predicated region
    $region82: #{gnn_feature_extractor_forward.1} parent=1 // pred_check
      _
    $region83: #{gnn_feature_extractor_forward.1} parent=1 // pred_check_branch
      %184 = sbr.rel (0) target = $region85
    $region84: #{gnn_feature_extractor_forward.1} parent=1 // pred_region
      _
    $region85: #{gnn_feature_extractor_forward.1} parent=1 // pred_fallthru
      _
    // Predicated region
    $region86: #{gnn_feature_extractor_forward.1} parent=1 // pred_check
      _
    $region87: #{gnn_feature_extractor_forward.1} parent=1 // pred_check_branch
      %186 = sbr.rel (0) target = $region89
    $region88: #{gnn_feature_extractor_forward.1} parent=1 // pred_region
      %s188 = ssub.s32 16, 16
      %189 = vsyncadd [#allocation15], %s188
      %s191 = sshll.u32 [#allocation14], 4
      %s192 = int_to_ptr.vmem [resolvable:$true] %s191
      %194 = dma.hbm_to_vmem [thread:$0]  %s43, 16, %s192, [#allocation15]
    $region89: #{gnn_feature_extractor_forward.1} parent=1 // pred_fallthru
      _
    // Predicated region
    $region90: #{gnn_feature_extractor_forward.1} parent=1 // pred_check
      _
    $region91: #{gnn_feature_extractor_forward.1} parent=1 // pred_check_branch
      %196 = sbr.rel (0) target = $region93
    $region92: #{gnn_feature_extractor_forward.1} parent=1 // pred_region
      _
    $region93: #{gnn_feature_extractor_forward.1} parent=1 // pred_fallthru
      _
    // Predicated region
    $region94: #{gnn_feature_extractor_forward.1} parent=1 // pred_check
      _
    $region95: #{gnn_feature_extractor_forward.1} parent=1 // pred_check_branch
      %198 = sbr.rel (0) target = $region97
    $region96: #{gnn_feature_extractor_forward.1} parent=1 // pred_region
      _
    $region97: #{gnn_feature_extractor_forward.1} parent=1 // pred_fallthru
      _
    // Predicated region
    $region98: #{gnn_feature_extractor_forward.1} parent=1 // pred_check
      _
    $region99: #{gnn_feature_extractor_forward.1} parent=1 // pred_check_branch
      %200 = sbr.rel (0) target = $region101
    $region100: #{gnn_feature_extractor_forward.1} parent=1 // pred_region
      _
    $region101: #{gnn_feature_extractor_forward.1} parent=1 // pred_fallthru
      _
    // Predicated region
    $region102: #{gnn_feature_extractor_forward.1} parent=1 // pred_check
      _
    $region103: #{gnn_feature_extractor_forward.1} parent=1 // pred_check_branch
      %202 = sbr.rel (0) target = $region105
    $region104: #{gnn_feature_extractor_forward.1} parent=1 // pred_region
      _
    $region105: #{gnn_feature_extractor_forward.1} parent=1 // pred_fallthru
      _
    // Predicated region
    $region106: #{gnn_feature_extractor_forward.1} parent=1 // pred_check
      _
    $region107: #{gnn_feature_extractor_forward.1} parent=1 // pred_check_branch
      %204 = sbr.rel (0) target = $region109
    $region108: #{gnn_feature_extractor_forward.1} parent=1 // pred_region
      _
    $region109: #{gnn_feature_extractor_forward.1} parent=1 // pred_fallthru
      _
    // Predicated region
    $region110: #{gnn_feature_extractor_forward.1} parent=1 // pred_check
      _
    $region111: #{gnn_feature_extractor_forward.1} parent=1 // pred_check_branch
      %206 = sbr.rel (0) target = $region113
    $region112: #{gnn_feature_extractor_forward.1} parent=1 // pred_region
      %s208 = ssub.s32 16, 16
      %209 = vsyncadd [#allocation15], %s208
      %s211 = sshll.u32 [#allocation16], 4
      %s212 = int_to_ptr.vmem [resolvable:$true] %s211
      %214 = dma.hbm_to_vmem [thread:$0]  %s55, 16, %s212, [#allocation15]
    $region113: #{gnn_feature_extractor_forward.1} parent=1 // pred_fallthru
      _
    // Predicated region
    $region114: #{gnn_feature_extractor_forward.1} parent=1 // pred_check
      _
    $region115: #{gnn_feature_extractor_forward.1} parent=1 // pred_check_branch
      %216 = sbr.rel (0) target = $region117
    $region116: #{gnn_feature_extractor_forward.1} parent=1 // pred_region
      _
    $region117: #{gnn_feature_extractor_forward.1} parent=1 // pred_fallthru
      _
    // Predicated region
    $region118: #{gnn_feature_extractor_forward.1} parent=1 // pred_check
      _
    $region119: #{gnn_feature_extractor_forward.1} parent=1 // pred_check_branch
      %218 = sbr.rel (0) target = $region121
    $region120: #{gnn_feature_extractor_forward.1} parent=1 // pred_region
      %s220 = ssub.s32 16, 16
      %221 = vsyncadd [#allocation18], %s220
      %s223 = sshll.u32 [#allocation17], 4
      %s224 = int_to_ptr.vmem [resolvable:$true] %s223
      %226 = dma.hbm_to_vmem [thread:$0]  %s59, 16, %s224, [#allocation18]
    $region121: #{gnn_feature_extractor_forward.1} parent=1 // pred_fallthru
      _
    // Predicated region
    $region122: #{gnn_feature_extractor_forward.1} parent=1 // pred_check
      _
    $region123: #{gnn_feature_extractor_forward.1} parent=1 // pred_check_branch
      %228 = sbr.rel (0) target = $region125
    $region124: #{gnn_feature_extractor_forward.1} parent=1 // pred_region
      %s230 = ssub.s32 512, 512
      %231 = vsyncadd [#allocation18], %s230
      %s232 = sshll.u32 [#allocation19], 4
      %s233 = int_to_ptr.vmem [resolvable:$true] %s232
      %238 = dma.hbm_to_vmem [thread:$0]  %s61, 512, %s233, [#allocation18], 128, 128, 8
    $region125: #{gnn_feature_extractor_forward.1} parent=1 // pred_fallthru
      _
    // Predicated region
    $region126: #{gnn_feature_extractor_forward.1} parent=1 // pred_check
      _
    $region127: #{gnn_feature_extractor_forward.1} parent=1 // pred_check_branch
      %240 = sbr.rel (0) target = $region129
    $region128: #{gnn_feature_extractor_forward.1} parent=1 // pred_region
      %s242 = ssub.s32 16, 16
      %243 = vsyncadd [#allocation21], %s242
      %s245 = sshll.u32 [#allocation20], 4
      %s246 = int_to_ptr.vmem [resolvable:$true] %s245
      %248 = dma.hbm_to_vmem [thread:$0]  %s63, 16, %s246, [#allocation21]
    $region129: #{gnn_feature_extractor_forward.1} parent=1 // pred_fallthru
      _
    // Predicated region
    $region130: #{gnn_feature_extractor_forward.1} parent=1 // pred_check
      _
    $region131: #{gnn_feature_extractor_forward.1} parent=1 // pred_check_branch
      %250 = sbr.rel (0) target = $region133
    $region132: #{gnn_feature_extractor_forward.1} parent=1 // pred_region
      _
    $region133: #{gnn_feature_extractor_forward.1} parent=1 // pred_fallthru
      _
    // Predicated region
    $region134: #{gnn_feature_extractor_forward.1} parent=1 // pred_check
      _
    $region135: #{gnn_feature_extractor_forward.1} parent=1 // pred_check_branch
      %252 = sbr.rel (0) target = $region137
    $region136: #{gnn_feature_extractor_forward.1} parent=1 // pred_region
      %s254 = ssub.s32 16, 16
      %255 = vsyncadd [#allocation21], %s254
      %s257 = sshll.u32 [#allocation22], 4
      %s258 = int_to_ptr.vmem [resolvable:$true] %s257
      %260 = dma.hbm_to_vmem [thread:$0]  %s67, 16, %s258, [#allocation21]
    $region137: #{gnn_feature_extractor_forward.1} parent=1 // pred_fallthru
      _
    // Predicated region
    $region138: #{gnn_feature_extractor_forward.1} parent=1 // pred_check
      _
    $region139: #{gnn_feature_extractor_forward.1} parent=1 // pred_check_branch
      %262 = sbr.rel (0) target = $region141
    $region140: #{gnn_feature_extractor_forward.1} parent=1 // pred_region
      %263 = dma.done [#allocation4], 256
    $region141: #{gnn_feature_extractor_forward.1} parent=1 // pred_fallthru
      _
    // Predicated region
    $region142: #{gnn_feature_extractor_forward.1} parent=1 // pred_check
      _
    $region143: #{gnn_feature_extractor_forward.1} parent=1 // pred_check_branch
      %265 = sbr.rel (0) target = $region145
    $region144: #{gnn_feature_extractor_forward.1} parent=1 // pred_region
      %266 = dma.done [#allocation6], 256
    $region145: #{gnn_feature_extractor_forward.1} parent=1 // pred_fallthru
      _
    // Predicated region
    $region146: #{gnn_feature_extractor_forward.1} parent=1 // pred_check
      _
    $region147: #{gnn_feature_extractor_forward.1} parent=1 // pred_check_branch
      %268 = sbr.rel (0) target = $region149
    $region148: #{gnn_feature_extractor_forward.1} parent=1 // pred_region
      %269 = dma.done [#allocation6], 32
    $region149: #{gnn_feature_extractor_forward.1} parent=1 // pred_fallthru
      _
    // Predicated region
    $region150: #{gnn_feature_extractor_forward.1} parent=1 // pred_check
      _
    $region151: #{gnn_feature_extractor_forward.1} parent=1 // pred_check_branch
      %271 = sbr.rel (0) target = $region153
    $region152: #{gnn_feature_extractor_forward.1} parent=1 // pred_region
      %272 = dma.done [#allocation9], 128
    $region153: #{gnn_feature_extractor_forward.1} parent=1 // pred_fallthru
      _
    // Predicated region
    $region154: #{gnn_feature_extractor_forward.1} parent=1 // pred_check
      _
    $region155: #{gnn_feature_extractor_forward.1} parent=1 // pred_check_branch
      %274 = sbr.rel (0) target = $region157
    $region156: #{gnn_feature_extractor_forward.1} parent=1 // pred_region
      %275 = dma.done [#allocation9], 16
    $region157: #{gnn_feature_extractor_forward.1} parent=1 // pred_fallthru
      _
    // Predicated region
    $region158: #{gnn_feature_extractor_forward.1} parent=1 // pred_check
      _
    $region159: #{gnn_feature_extractor_forward.1} parent=1 // pred_check_branch
      %277 = sbr.rel (0) target = $region161
    $region160: #{gnn_feature_extractor_forward.1} parent=1 // pred_region
      %278 = dma.done [#allocation12], 16
    $region161: #{gnn_feature_extractor_forward.1} parent=1 // pred_fallthru
      _
    // Predicated region
    $region162: #{gnn_feature_extractor_forward.1} parent=1 // pred_check
      _
    $region163: #{gnn_feature_extractor_forward.1} parent=1 // pred_check_branch
      %280 = sbr.rel (0) target = $region165
    $region164: #{gnn_feature_extractor_forward.1} parent=1 // pred_region
      %281 = dma.done [#allocation12], 16
    $region165: #{gnn_feature_extractor_forward.1} parent=1 // pred_fallthru
      _
    // Predicated region
    $region166: #{gnn_feature_extractor_forward.1} parent=1 // pred_check
      _
    $region167: #{gnn_feature_extractor_forward.1} parent=1 // pred_check_branch
      %283 = sbr.rel (0) target = $region169
    $region168: #{gnn_feature_extractor_forward.1} parent=1 // pred_region
      %284 = dma.done [#allocation15], 16
    $region169: #{gnn_feature_extractor_forward.1} parent=1 // pred_fallthru
      _
    // Predicated region
    $region170: #{gnn_feature_extractor_forward.1} parent=1 // pred_check
      _
    $region171: #{gnn_feature_extractor_forward.1} parent=1 // pred_check_branch
      %286 = sbr.rel (0) target = $region173
    $region172: #{gnn_feature_extractor_forward.1} parent=1 // pred_region
      %287 = dma.done [#allocation15], 16
    $region173: #{gnn_feature_extractor_forward.1} parent=1 // pred_fallthru
      _
    // Predicated region
    $region174: #{gnn_feature_extractor_forward.1} parent=1 // pred_check
      _
    $region175: #{gnn_feature_extractor_forward.1} parent=1 // pred_check_branch
      %289 = sbr.rel (0) target = $region177
    $region176: #{gnn_feature_extractor_forward.1} parent=1 // pred_region
      %290 = dma.done [#allocation18], 16
    $region177: #{gnn_feature_extractor_forward.1} parent=1 // pred_fallthru
      _
    // Predicated region
    $region178: #{gnn_feature_extractor_forward.1} parent=1 // pred_check
      _
    $region179: #{gnn_feature_extractor_forward.1} parent=1 // pred_check_branch
      %292 = sbr.rel (0) target = $region181
    $region180: #{gnn_feature_extractor_forward.1} parent=1 // pred_region
      %293 = dma.done [#allocation18], 512
    $region181: #{gnn_feature_extractor_forward.1} parent=1 // pred_fallthru
      _
    // Predicated region
    $region182: #{gnn_feature_extractor_forward.1} parent=1 // pred_check
      _
    $region183: #{gnn_feature_extractor_forward.1} parent=1 // pred_check_branch
      %295 = sbr.rel (0) target = $region185
    $region184: #{gnn_feature_extractor_forward.1} parent=1 // pred_region
      %296 = dma.done [#allocation21], 16
    $region185: #{gnn_feature_extractor_forward.1} parent=1 // pred_fallthru
      _
    // Predicated region
    $region186: #{gnn_feature_extractor_forward.1} parent=1 // pred_check
      _
    $region187: #{gnn_feature_extractor_forward.1} parent=1 // pred_check_branch
      %298 = sbr.rel (0) target = $region189
    $region188: #{gnn_feature_extractor_forward.1} parent=1 // pred_region
      %299 = dma.done [#allocation21], 16
    $region189: #{gnn_feature_extractor_forward.1} parent=1 // pred_fallthru
      _
    %v300 = vld [vmem:[#allocation3] sm:$0xff]
    %v301 = vld [vmem:[#allocation3 + $0x8] sm:$0xff]
    %v302 = vld [vmem:[%s3] sm:$0xff]
    %v303 = vld [vmem:[%s3 + $0x8] sm:$0xff]
    %v304 = vld [vmem:[%s13] sm:$0xf]
    %vm305 = vcmask 31744
    %v307 = vsel %vm305, %v302, 0
    %v310 = vsel %vm305, %v303, 0
    %vm312 = vcmask 1043456
    %v314 = vsel %vm312, %v304, 0
    %316 = vmatprep.subr.mxu0 0.0
    %317 = vmatpush1.msra.mxu0 0.0
    %318 = vmatprep.subr.mxu0 0.0
    %319 = vmatpush1.msra.mxu0 0.0
    %320 = vmatprep.subr.mxu0 0.0
    %321 = vmatpush1.msra.mxu0 0.0
    %322 = vmatprep.subr.mxu0 0.0
    %323 = vmatpush1.msra.mxu0 0.0
    %324 = vmatprep.subr.mxu0 0.0
    %325 = vmatpush1.msra.mxu0 0.0
    %326 = vmatprep.subr.mxu0 0.0
    %327 = vmatpush1.msra.mxu0 0.0
    %328 = vmatprep.subr.mxu0 0.0
    %329 = vmatpush1.msra.mxu0 0.0
    %330 = vmatprep.subr.mxu0 0.0
    %331 = vmatpush1.msra.mxu0 0.0
    %332 = vmatprep.subr.mxu0 0.0
    %333 = vmatpush1.msra.mxu0 0.0
    %334 = vmatprep.subr.mxu0 0.0
    %335 = vmatpush1.msra.mxu0 0.0
    %336 = vmatprep.subr.mxu0 0.0
    %337 = vmatpush1.msra.mxu0 0.0
    %338 = vmatprep.subr.mxu0 0.0
    %339 = vmatpush1.msra.mxu0 0.0
    %340 = vmatprep.subr.mxu0 0.0
    %341 = vmatpush1.msra.mxu0 0.0
    %342 = vmatprep.subr.mxu0 0.0
    %343 = vmatpush1.msra.mxu0 0.0
    %344 = vmatprep.subr.mxu0 0.0
    %345 = vmatpush1.msra.mxu0 0.0
    %346 = vmatprep.subr.mxu0 0.0
    %347 = vmatpush1.msra.mxu0 %v314
    %348 = vmatprep.subr.mxu0 0.0
    %349 = vmatpush2.msra.mxu0 0.0
    %350 = vmatprep.subr.mxu0 0.0
    %351 = vmatpush2.msra.mxu0 0.0
    %352 = vmatprep.subr.mxu0 0.0
    %353 = vmatpush2.msra.mxu0 0.0
    %354 = vmatprep.subr.mxu0 0.0
    %355 = vmatpush2.msra.mxu0 0.0
    %356 = vmatprep.subr.mxu0 0.0
    %357 = vmatpush2.msra.mxu0 0.0
    %358 = vmatprep.subr.mxu0 0.0
    %359 = vmatpush2.msra.mxu0 0.0
    %360 = vmatprep.subr.mxu0 0.0
    %361 = vmatpush2.msra.mxu0 0.0
    %362 = vmatprep.subr.mxu0 0.0
    %363 = vmatpush2.msra.mxu0 0.0
    %364 = vmatprep.subr.mxu0 0.0
    %365 = vmatpush2.msra.mxu0 0.0
    %366 = vmatprep.subr.mxu0 0.0
    %367 = vmatpush2.msra.mxu0 0.0
    %368 = vmatprep.subr.mxu0 0.0
    %369 = vmatpush2.msra.mxu0 0.0
    %370 = vmatprep.subr.mxu0 0.0
    %371 = vmatpush2.msra.mxu0 0.0
    %372 = vmatprep.subr.mxu0 0.0
    %373 = vmatpush2.msra.mxu0 0.0
    %374 = vmatprep.subr.mxu0 0.0
    %375 = vmatpush2.msra.mxu0 0.0
    %376 = vmatprep.subr.mxu0 0.0
    %377 = vmatpush2.msra.mxu0 0.0
    %378 = vmatprep.subr.mxu0 0.0
    %379 = vmatpush2.msra.mxu0 0.0
    %380 = vmatprep.mubr.f32.mxu0 0.0
    %381 = vmatmul.mubr.f32.gmra.mxu0 %v307
    %v382 = vpop.f32.mrf.mxu0
    %v383 = vadd.f32 0.0, %v382
    %v384 = vpop.f32.mrf.mxu0
    %385 = vmatprep.mubr.f32.mxu0 0.0
    %386 = vmatmul.mubr.f32.gmra.mxu0 %v310
    %v387 = vpop.f32.mrf.mxu0
    %v388 = vadd.f32 0.0, %v387
    %v389 = vpop.f32.mrf.mxu0
    %390 = vdwg.mxu0
    %v391 = vld [vmem:[%s15] sm:$0x1]
    %v393 = vlaneseq
    %v394 = vshrl.u32 %v393, 7
    %v395 = vsub.s32 0, %v394
    %v396 = vrot.slane %v391, %v395
    %vm398 = vcmask 130048
    %v400 = vsel %vm398, %v300, 0
    %v403 = vsel %vm398, %v301, 0
    %405 = vmatprep.subr.mxu0 0.0
    %406 = vmatpush1.msra.mxu0 0.0
    %407 = vmatprep.subr.mxu0 0.0
    %408 = vmatpush1.msra.mxu0 0.0
    %409 = vmatprep.subr.mxu0 0.0
    %410 = vmatpush1.msra.mxu0 0.0
    %411 = vmatprep.subr.mxu0 0.0
    %412 = vmatpush1.msra.mxu0 0.0
    %413 = vmatprep.subr.mxu0 0.0
    %414 = vmatpush1.msra.mxu0 0.0
    %415 = vmatprep.subr.mxu0 0.0
    %416 = vmatpush1.msra.mxu0 0.0
    %417 = vmatprep.subr.mxu0 0.0
    %418 = vmatpush1.msra.mxu0 0.0
    %419 = vmatprep.subr.mxu0 0.0
    %420 = vmatpush1.msra.mxu0 0.0
    %421 = vmatprep.subr.mxu0 0.0
    %422 = vmatpush1.msra.mxu0 0.0
    %423 = vmatprep.subr.mxu0 0.0
    %424 = vmatpush1.msra.mxu0 0.0
    %425 = vmatprep.subr.mxu0 0.0
    %426 = vmatpush1.msra.mxu0 0.0
    %427 = vmatprep.subr.mxu0 0.0
    %428 = vmatpush1.msra.mxu0 0.0
    %429 = vmatprep.subr.mxu0 0.0
    %430 = vmatpush1.msra.mxu0 0.0
    %431 = vmatprep.subr.mxu0 0.0
    %432 = vmatpush1.msra.mxu0 0.0
    %433 = vmatprep.subr.mxu0 0.0
    %434 = vmatpush1.msra.mxu0 %v388
    %435 = vmatprep.subr.mxu0 0.0
    %436 = vmatpush1.msra.mxu0 %v383
    %437 = vmatprep.subr.mxu0 0.0
    %438 = vmatpush2.msra.mxu0 0.0
    %439 = vmatprep.subr.mxu0 0.0
    %440 = vmatpush2.msra.mxu0 0.0
    %441 = vmatprep.subr.mxu0 0.0
    %442 = vmatpush2.msra.mxu0 0.0
    %443 = vmatprep.subr.mxu0 0.0
    %444 = vmatpush2.msra.mxu0 0.0
    %445 = vmatprep.subr.mxu0 0.0
    %446 = vmatpush2.msra.mxu0 0.0
    %447 = vmatprep.subr.mxu0 0.0
    %448 = vmatpush2.msra.mxu0 0.0
    %449 = vmatprep.subr.mxu0 0.0
    %450 = vmatpush2.msra.mxu0 0.0
    %451 = vmatprep.subr.mxu0 0.0
    %452 = vmatpush2.msra.mxu0 0.0
    %453 = vmatprep.subr.mxu0 0.0
    %454 = vmatpush2.msra.mxu0 0.0
    %455 = vmatprep.subr.mxu0 0.0
    %456 = vmatpush2.msra.mxu0 0.0
    %457 = vmatprep.subr.mxu0 0.0
    %458 = vmatpush2.msra.mxu0 0.0
    %459 = vmatprep.subr.mxu0 0.0
    %460 = vmatpush2.msra.mxu0 0.0
    %461 = vmatprep.subr.mxu0 0.0
    %462 = vmatpush2.msra.mxu0 0.0
    %463 = vmatprep.subr.mxu0 0.0
    %464 = vmatpush2.msra.mxu0 0.0
    %465 = vmatprep.subr.mxu0 0.0
    %466 = vmatpush2.msra.mxu0 0.0
    %467 = vmatprep.subr.mxu0 0.0
    %468 = vmatpush2.msra.mxu0 0.0
    %469 = vmatprep.mubr.f32.mxu0 0.0
    %470 = vmatmul.mubr.f32.gmra.mxu0 %v400
    %v471 = vpop.f32.mrf.mxu0
    %v472 = vadd.f32 %v396, %v471
    %v473 = vpop.f32.mrf.mxu0
    %474 = vmatprep.mubr.f32.mxu0 0.0
    %475 = vmatmul.mubr.f32.gmra.mxu0 %v403
    %v476 = vpop.f32.mrf.mxu0
    %v477 = vadd.f32 %v396, %v476
    %v478 = vpop.f32.mrf.mxu0
    %479 = vdwg.mxu0
    %vm480 = vcmp.ge.f32.partialorder %v472, 0.0
    %vm481 = vcmp.ge.f32.partialorder %v477, 0.0
    %v482 = vmul.f32 %v472, 0.2
    %v483 = vmul.f32 %v477, 0.2
    %v484 = vsel %vm480, %v472, %v482
    %v485 = vsel %vm481, %v477, %v483
    %v486 = vld [vmem:[%s17] sm:$0xff]
    %v487 = vld [vmem:[%s17 + $0x8] sm:$0xff]
    %v488 = vld [vmem:[%s17 + $0x10] sm:$0xff]
    %v489 = vld [vmem:[%s17 + $0x18] sm:$0xff]
    %vm490 = vcmask 261120
    %v492 = vsel %vm490, %v484, 0
    %v495 = vsel %vm490, %v485, 0
    %497 = vmatprep.subr.mxu0 0.0
    %498 = vmatpush1.msra.mxu0 0.0
    %499 = vmatprep.subr.mxu0 0.0
    %500 = vmatpush1.msra.mxu0 0.0
    %501 = vmatprep.subr.mxu0 0.0
    %502 = vmatpush1.msra.mxu0 0.0
    %503 = vmatprep.subr.mxu0 0.0
    %504 = vmatpush1.msra.mxu0 0.0
    %505 = vmatprep.subr.mxu0 0.0
    %506 = vmatpush1.msra.mxu0 0.0
    %507 = vmatprep.subr.mxu0 0.0
    %508 = vmatpush1.msra.mxu0 0.0
    %509 = vmatprep.subr.mxu0 0.0
    %510 = vmatpush1.msra.mxu0 0.0
    %511 = vmatprep.subr.mxu0 0.0
    %512 = vmatpush1.msra.mxu0 0.0
    %513 = vmatprep.subr.mxu0 0.0
    %514 = vmatpush1.msra.mxu0 0.0
    %515 = vmatprep.subr.mxu0 0.0
    %516 = vmatpush1.msra.mxu0 0.0
    %517 = vmatprep.subr.mxu0 0.0
    %518 = vmatpush1.msra.mxu0 0.0
    %519 = vmatprep.subr.mxu0 0.0
    %520 = vmatpush1.msra.mxu0 0.0
    %521 = vmatprep.subr.mxu0 0.0
    %522 = vmatpush1.msra.mxu0 %v489
    %523 = vmatprep.subr.mxu0 0.0
    %524 = vmatpush1.msra.mxu0 %v488
    %525 = vmatprep.subr.mxu0 0.0
    %526 = vmatpush1.msra.mxu0 %v487
    %527 = vmatprep.subr.mxu0 0.0
    %528 = vmatpush1.msra.mxu0 %v486
    %529 = vmatprep.subr.mxu0 0.0
    %530 = vmatpush2.msra.mxu0 0.0
    %531 = vmatprep.subr.mxu0 0.0
    %532 = vmatpush2.msra.mxu0 0.0
    %533 = vmatprep.subr.mxu0 0.0
    %534 = vmatpush2.msra.mxu0 0.0
    %535 = vmatprep.subr.mxu0 0.0
    %536 = vmatpush2.msra.mxu0 0.0
    %537 = vmatprep.subr.mxu0 0.0
    %538 = vmatpush2.msra.mxu0 0.0
    %539 = vmatprep.subr.mxu0 0.0
    %540 = vmatpush2.msra.mxu0 0.0
    %541 = vmatprep.subr.mxu0 0.0
    %542 = vmatpush2.msra.mxu0 0.0
    %543 = vmatprep.subr.mxu0 0.0
    %544 = vmatpush2.msra.mxu0 0.0
    %545 = vmatprep.subr.mxu0 0.0
    %546 = vmatpush2.msra.mxu0 0.0
    %547 = vmatprep.subr.mxu0 0.0
    %548 = vmatpush2.msra.mxu0 0.0
    %549 = vmatprep.subr.mxu0 0.0
    %550 = vmatpush2.msra.mxu0 0.0
    %551 = vmatprep.subr.mxu0 0.0
    %552 = vmatpush2.msra.mxu0 0.0
    %553 = vmatprep.subr.mxu0 0.0
    %554 = vmatpush2.msra.mxu0 0.0
    %555 = vmatprep.subr.mxu0 0.0
    %556 = vmatpush2.msra.mxu0 0.0
    %557 = vmatprep.subr.mxu0 0.0
    %558 = vmatpush2.msra.mxu0 0.0
    %559 = vmatprep.subr.mxu0 0.0
    %560 = vmatpush2.msra.mxu0 0.0
    %561 = vmatprep.mubr.f32.mxu0 0.0
    %562 = vmatmul.mubr.f32.gmra.mxu0 %v492
    %v563 = vpop.f32.mrf.mxu0
    %v564 = vadd.f32 0.0, %v563
    %v565 = vpop.f32.mrf.mxu0
    %566 = vmatprep.mubr.f32.mxu0 0.0
    %567 = vmatmul.mubr.f32.gmra.mxu0 %v495
    %v568 = vpop.f32.mrf.mxu0
    %v569 = vadd.f32 0.0, %v568
    %v570 = vpop.f32.mrf.mxu0
    %571 = vdwg.mxu0
    %v572 = vld [vmem:[%s19] sm:$0x1]
    %v574 = vlaneseq
    %v575 = vshrl.u32 %v574, 7
    %v576 = vsub.s32 0, %v575
    %v577 = vrot.slane %v572, %v576
    %579 = vmatprep.subr.mxu0 0.0
    %580 = vmatpush1.msra.mxu0 0.0
    %581 = vmatprep.subr.mxu0 0.0
    %582 = vmatpush1.msra.mxu0 0.0
    %583 = vmatprep.subr.mxu0 0.0
    %584 = vmatpush1.msra.mxu0 0.0
    %585 = vmatprep.subr.mxu0 0.0
    %586 = vmatpush1.msra.mxu0 0.0
    %587 = vmatprep.subr.mxu0 0.0
    %588 = vmatpush1.msra.mxu0 0.0
    %589 = vmatprep.subr.mxu0 0.0
    %590 = vmatpush1.msra.mxu0 0.0
    %591 = vmatprep.subr.mxu0 0.0
    %592 = vmatpush1.msra.mxu0 0.0
    %593 = vmatprep.subr.mxu0 0.0
    %594 = vmatpush1.msra.mxu0 0.0
    %595 = vmatprep.subr.mxu0 0.0
    %596 = vmatpush1.msra.mxu0 0.0
    %597 = vmatprep.subr.mxu0 0.0
    %598 = vmatpush1.msra.mxu0 0.0
    %599 = vmatprep.subr.mxu0 0.0
    %600 = vmatpush1.msra.mxu0 0.0
    %601 = vmatprep.subr.mxu0 0.0
    %602 = vmatpush1.msra.mxu0 0.0
    %603 = vmatprep.subr.mxu0 0.0
    %604 = vmatpush1.msra.mxu0 0.0
    %605 = vmatprep.subr.mxu0 0.0
    %606 = vmatpush1.msra.mxu0 0.0
    %607 = vmatprep.subr.mxu0 0.0
    %608 = vmatpush1.msra.mxu0 %v569
    %609 = vmatprep.subr.mxu0 0.0
    %610 = vmatpush1.msra.mxu0 %v564
    %611 = vmatprep.subr.mxu0 0.0
    %612 = vmatpush2.msra.mxu0 0.0
    %613 = vmatprep.subr.mxu0 0.0
    %614 = vmatpush2.msra.mxu0 0.0
    %615 = vmatprep.subr.mxu0 0.0
    %616 = vmatpush2.msra.mxu0 0.0
    %617 = vmatprep.subr.mxu0 0.0
    %618 = vmatpush2.msra.mxu0 0.0
    %619 = vmatprep.subr.mxu0 0.0
    %620 = vmatpush2.msra.mxu0 0.0
    %621 = vmatprep.subr.mxu0 0.0
    %622 = vmatpush2.msra.mxu0 0.0
    %623 = vmatprep.subr.mxu0 0.0
    %624 = vmatpush2.msra.mxu0 0.0
    %625 = vmatprep.subr.mxu0 0.0
    %626 = vmatpush2.msra.mxu0 0.0
    %627 = vmatprep.subr.mxu0 0.0
    %628 = vmatpush2.msra.mxu0 0.0
    %629 = vmatprep.subr.mxu0 0.0
    %630 = vmatpush2.msra.mxu0 0.0
    %631 = vmatprep.subr.mxu0 0.0
    %632 = vmatpush2.msra.mxu0 0.0
    %633 = vmatprep.subr.mxu0 0.0
    %634 = vmatpush2.msra.mxu0 0.0
    %635 = vmatprep.subr.mxu0 0.0
    %636 = vmatpush2.msra.mxu0 0.0
    %637 = vmatprep.subr.mxu0 0.0
    %638 = vmatpush2.msra.mxu0 0.0
    %639 = vmatprep.subr.mxu0 0.0
    %640 = vmatpush2.msra.mxu0 0.0
    %641 = vmatprep.subr.mxu0 0.0
    %642 = vmatpush2.msra.mxu0 0.0
    %643 = vmatprep.mubr.f32.mxu0 0.0
    %644 = vmatmul.mubr.f32.gmra.mxu0 %v400
    %v645 = vpop.f32.mrf.mxu0
    %v646 = vadd.f32 %v577, %v645
    %v647 = vpop.f32.mrf.mxu0
    %648 = vmatprep.mubr.f32.mxu0 0.0
    %649 = vmatmul.mubr.f32.gmra.mxu0 %v403
    %v650 = vpop.f32.mrf.mxu0
    %v651 = vadd.f32 %v577, %v650
    %v652 = vpop.f32.mrf.mxu0
    %653 = vdwg.mxu0
    %v654 = vadd.f32 %v646, %v472
    %v655 = vadd.f32 %v651, %v477
    %vm656 = vcmp.ge.f32.partialorder %v654, 0.0
    %vm657 = vcmp.ge.f32.partialorder %v655, 0.0
    %v658 = vmul.f32 %v654, 0.2
    %v659 = vmul.f32 %v655, 0.2
    %v660 = vsel %vm656, %v654, %v658
    %v661 = vsel %vm657, %v655, %v659
    %v662 = vld [vmem:[%s21] sm:$0xff]
    %v663 = vld [vmem:[%s21 + $0x8] sm:$0xff]
    %v664 = vld [vmem:[%s21 + $0x10] sm:$0xff]
    %v665 = vld [vmem:[%s21 + $0x18] sm:$0xff]
    %v667 = vsel %vm490, %v660, 0
    %v670 = vsel %vm490, %v661, 0
    %672 = vmatprep.subr.mxu0 0.0
    %673 = vmatpush1.msra.mxu0 0.0
    %674 = vmatprep.subr.mxu0 0.0
    %675 = vmatpush1.msra.mxu0 0.0
    %676 = vmatprep.subr.mxu0 0.0
    %677 = vmatpush1.msra.mxu0 0.0
    %678 = vmatprep.subr.mxu0 0.0
    %679 = vmatpush1.msra.mxu0 0.0
    %680 = vmatprep.subr.mxu0 0.0
    %681 = vmatpush1.msra.mxu0 0.0
    %682 = vmatprep.subr.mxu0 0.0
    %683 = vmatpush1.msra.mxu0 0.0
    %684 = vmatprep.subr.mxu0 0.0
    %685 = vmatpush1.msra.mxu0 0.0
    %686 = vmatprep.subr.mxu0 0.0
    %687 = vmatpush1.msra.mxu0 0.0
    %688 = vmatprep.subr.mxu0 0.0
    %689 = vmatpush1.msra.mxu0 0.0
    %690 = vmatprep.subr.mxu0 0.0
    %691 = vmatpush1.msra.mxu0 0.0
    %692 = vmatprep.subr.mxu0 0.0
    %693 = vmatpush1.msra.mxu0 0.0
    %694 = vmatprep.subr.mxu0 0.0
    %695 = vmatpush1.msra.mxu0 0.0
    %696 = vmatprep.subr.mxu0 0.0
    %697 = vmatpush1.msra.mxu0 %v665
    %698 = vmatprep.subr.mxu0 0.0
    %699 = vmatpush1.msra.mxu0 %v664
    %700 = vmatprep.subr.mxu0 0.0
    %701 = vmatpush1.msra.mxu0 %v663
    %702 = vmatprep.subr.mxu0 0.0
    %703 = vmatpush1.msra.mxu0 %v662
    %704 = vmatprep.subr.mxu0 0.0
    %705 = vmatpush2.msra.mxu0 0.0
    %706 = vmatprep.subr.mxu0 0.0
    %707 = vmatpush2.msra.mxu0 0.0
    %708 = vmatprep.subr.mxu0 0.0
    %709 = vmatpush2.msra.mxu0 0.0
    %710 = vmatprep.subr.mxu0 0.0
    %711 = vmatpush2.msra.mxu0 0.0
    %712 = vmatprep.subr.mxu0 0.0
    %713 = vmatpush2.msra.mxu0 0.0
    %714 = vmatprep.subr.mxu0 0.0
    %715 = vmatpush2.msra.mxu0 0.0
    %716 = vmatprep.subr.mxu0 0.0
    %717 = vmatpush2.msra.mxu0 0.0
    %718 = vmatprep.subr.mxu0 0.0
    %719 = vmatpush2.msra.mxu0 0.0
    %720 = vmatprep.subr.mxu0 0.0
    %721 = vmatpush2.msra.mxu0 0.0
    %722 = vmatprep.subr.mxu0 0.0
    %723 = vmatpush2.msra.mxu0 0.0
    %724 = vmatprep.subr.mxu0 0.0
    %725 = vmatpush2.msra.mxu0 0.0
    %726 = vmatprep.subr.mxu0 0.0
    %727 = vmatpush2.msra.mxu0 0.0
    %728 = vmatprep.subr.mxu0 0.0
    %729 = vmatpush2.msra.mxu0 0.0
    %730 = vmatprep.subr.mxu0 0.0
    %731 = vmatpush2.msra.mxu0 0.0
    %732 = vmatprep.subr.mxu0 0.0
    %733 = vmatpush2.msra.mxu0 0.0
    %734 = vmatprep.subr.mxu0 0.0
    %735 = vmatpush2.msra.mxu0 0.0
    %736 = vmatprep.mubr.f32.mxu0 0.0
    %737 = vmatmul.mubr.f32.gmra.mxu0 %v667
    %v738 = vpop.f32.mrf.mxu0
    %v739 = vadd.f32 0.0, %v738
    %v740 = vpop.f32.mrf.mxu0
    %741 = vmatprep.mubr.f32.mxu0 0.0
    %742 = vmatmul.mubr.f32.gmra.mxu0 %v670
    %v743 = vpop.f32.mrf.mxu0
    %v744 = vadd.f32 0.0, %v743
    %v745 = vpop.f32.mrf.mxu0
    %746 = vdwg.mxu0
    %v747 = vld [vmem:[%s23] sm:$0x1]
    %v749 = vlaneseq
    %v750 = vshrl.u32 %v749, 7
    %v751 = vsub.s32 0, %v750
    %v752 = vrot.slane %v747, %v751
    %754 = vmatprep.subr.mxu0 0.0
    %755 = vmatpush1.msra.mxu0 0.0
    %756 = vmatprep.subr.mxu0 0.0
    %757 = vmatpush1.msra.mxu0 0.0
    %758 = vmatprep.subr.mxu0 0.0
    %759 = vmatpush1.msra.mxu0 0.0
    %760 = vmatprep.subr.mxu0 0.0
    %761 = vmatpush1.msra.mxu0 0.0
    %762 = vmatprep.subr.mxu0 0.0
    %763 = vmatpush1.msra.mxu0 0.0
    %764 = vmatprep.subr.mxu0 0.0
    %765 = vmatpush1.msra.mxu0 0.0
    %766 = vmatprep.subr.mxu0 0.0
    %767 = vmatpush1.msra.mxu0 0.0
    %768 = vmatprep.subr.mxu0 0.0
    %769 = vmatpush1.msra.mxu0 0.0
    %770 = vmatprep.subr.mxu0 0.0
    %771 = vmatpush1.msra.mxu0 0.0
    %772 = vmatprep.subr.mxu0 0.0
    %773 = vmatpush1.msra.mxu0 0.0
    %774 = vmatprep.subr.mxu0 0.0
    %775 = vmatpush1.msra.mxu0 0.0
    %776 = vmatprep.subr.mxu0 0.0
    %777 = vmatpush1.msra.mxu0 0.0
    %778 = vmatprep.subr.mxu0 0.0
    %779 = vmatpush1.msra.mxu0 0.0
    %780 = vmatprep.subr.mxu0 0.0
    %781 = vmatpush1.msra.mxu0 0.0
    %782 = vmatprep.subr.mxu0 0.0
    %783 = vmatpush1.msra.mxu0 %v744
    %784 = vmatprep.subr.mxu0 0.0
    %785 = vmatpush1.msra.mxu0 %v739
    %786 = vmatprep.subr.mxu0 0.0
    %787 = vmatpush2.msra.mxu0 0.0
    %788 = vmatprep.subr.mxu0 0.0
    %789 = vmatpush2.msra.mxu0 0.0
    %790 = vmatprep.subr.mxu0 0.0
    %791 = vmatpush2.msra.mxu0 0.0
    %792 = vmatprep.subr.mxu0 0.0
    %793 = vmatpush2.msra.mxu0 0.0
    %794 = vmatprep.subr.mxu0 0.0
    %795 = vmatpush2.msra.mxu0 0.0
    %796 = vmatprep.subr.mxu0 0.0
    %797 = vmatpush2.msra.mxu0 0.0
    %798 = vmatprep.subr.mxu0 0.0
    %799 = vmatpush2.msra.mxu0 0.0
    %800 = vmatprep.subr.mxu0 0.0
    %801 = vmatpush2.msra.mxu0 0.0
    %802 = vmatprep.subr.mxu0 0.0
    %803 = vmatpush2.msra.mxu0 0.0
    %804 = vmatprep.subr.mxu0 0.0
    %805 = vmatpush2.msra.mxu0 0.0
    %806 = vmatprep.subr.mxu0 0.0
    %807 = vmatpush2.msra.mxu0 0.0
    %808 = vmatprep.subr.mxu0 0.0
    %809 = vmatpush2.msra.mxu0 0.0
    %810 = vmatprep.subr.mxu0 0.0
    %811 = vmatpush2.msra.mxu0 0.0
    %812 = vmatprep.subr.mxu0 0.0
    %813 = vmatpush2.msra.mxu0 0.0
    %814 = vmatprep.subr.mxu0 0.0
    %815 = vmatpush2.msra.mxu0 0.0
    %816 = vmatprep.subr.mxu0 0.0
    %817 = vmatpush2.msra.mxu0 0.0
    %818 = vmatprep.mubr.f32.mxu0 0.0
    %819 = vmatmul.mubr.f32.gmra.mxu0 %v400
    %v820 = vpop.f32.mrf.mxu0
    %v821 = vadd.f32 %v752, %v820
    %v822 = vpop.f32.mrf.mxu0
    %823 = vmatprep.mubr.f32.mxu0 0.0
    %824 = vmatmul.mubr.f32.gmra.mxu0 %v403
    %v825 = vpop.f32.mrf.mxu0
    %v826 = vadd.f32 %v752, %v825
    %v827 = vpop.f32.mrf.mxu0
    %828 = vdwg.mxu0
    %v829 = vadd.f32 %v821, %v654
    %v830 = vadd.f32 %v826, %v655
    %vm831 = vcmp.ge.f32.partialorder %v829, 0.0
    %vm832 = vcmp.ge.f32.partialorder %v830, 0.0
    %v833 = vmul.f32 %v829, 0.2
    %v834 = vmul.f32 %v830, 0.2
    %v835 = vsel %vm831, %v829, %v833
    %v836 = vsel %vm832, %v830, %v834
    %v837 = vld [vmem:[%s25] sm:$0xff]
    %v838 = vld [vmem:[%s25 + $0x8] sm:$0xff]
    %v839 = vld [vmem:[%s25 + $0x10] sm:$0xff]
    %v840 = vld [vmem:[%s25 + $0x18] sm:$0xff]
    %v842 = vsel %vm490, %v835, 0
    %v845 = vsel %vm490, %v836, 0
    %847 = vmatprep.subr.mxu0 0.0
    %848 = vmatpush1.msra.mxu0 0.0
    %849 = vmatprep.subr.mxu0 0.0
    %850 = vmatpush1.msra.mxu0 0.0
    %851 = vmatprep.subr.mxu0 0.0
    %852 = vmatpush1.msra.mxu0 0.0
    %853 = vmatprep.subr.mxu0 0.0
    %854 = vmatpush1.msra.mxu0 0.0
    %855 = vmatprep.subr.mxu0 0.0
    %856 = vmatpush1.msra.mxu0 0.0
    %857 = vmatprep.subr.mxu0 0.0
    %858 = vmatpush1.msra.mxu0 0.0
    %859 = vmatprep.subr.mxu0 0.0
    %860 = vmatpush1.msra.mxu0 0.0
    %861 = vmatprep.subr.mxu0 0.0
    %862 = vmatpush1.msra.mxu0 0.0
    %863 = vmatprep.subr.mxu0 0.0
    %864 = vmatpush1.msra.mxu0 0.0
    %865 = vmatprep.subr.mxu0 0.0
    %866 = vmatpush1.msra.mxu0 0.0
    %867 = vmatprep.subr.mxu0 0.0
    %868 = vmatpush1.msra.mxu0 0.0
    %869 = vmatprep.subr.mxu0 0.0
    %870 = vmatpush1.msra.mxu0 0.0
    %871 = vmatprep.subr.mxu0 0.0
    %872 = vmatpush1.msra.mxu0 %v840
    %873 = vmatprep.subr.mxu0 0.0
    %874 = vmatpush1.msra.mxu0 %v839
    %875 = vmatprep.subr.mxu0 0.0
    %876 = vmatpush1.msra.mxu0 %v838
    %877 = vmatprep.subr.mxu0 0.0
    %878 = vmatpush1.msra.mxu0 %v837
    %879 = vmatprep.subr.mxu0 0.0
    %880 = vmatpush2.msra.mxu0 0.0
    %881 = vmatprep.subr.mxu0 0.0
    %882 = vmatpush2.msra.mxu0 0.0
    %883 = vmatprep.subr.mxu0 0.0
    %884 = vmatpush2.msra.mxu0 0.0
    %885 = vmatprep.subr.mxu0 0.0
    %886 = vmatpush2.msra.mxu0 0.0
    %887 = vmatprep.subr.mxu0 0.0
    %888 = vmatpush2.msra.mxu0 0.0
    %889 = vmatprep.subr.mxu0 0.0
    %890 = vmatpush2.msra.mxu0 0.0
    %891 = vmatprep.subr.mxu0 0.0
    %892 = vmatpush2.msra.mxu0 0.0
    %893 = vmatprep.subr.mxu0 0.0
    %894 = vmatpush2.msra.mxu0 0.0
    %895 = vmatprep.subr.mxu0 0.0
    %896 = vmatpush2.msra.mxu0 0.0
    %897 = vmatprep.subr.mxu0 0.0
    %898 = vmatpush2.msra.mxu0 0.0
    %899 = vmatprep.subr.mxu0 0.0
    %900 = vmatpush2.msra.mxu0 0.0
    %901 = vmatprep.subr.mxu0 0.0
    %902 = vmatpush2.msra.mxu0 0.0
    %903 = vmatprep.subr.mxu0 0.0
    %904 = vmatpush2.msra.mxu0 0.0
    %905 = vmatprep.subr.mxu0 0.0
    %906 = vmatpush2.msra.mxu0 0.0
    %907 = vmatprep.subr.mxu0 0.0
    %908 = vmatpush2.msra.mxu0 0.0
    %909 = vmatprep.subr.mxu0 0.0
    %910 = vmatpush2.msra.mxu0 0.0
    %911 = vmatprep.mubr.f32.mxu0 0.0
    %912 = vmatmul.mubr.f32.gmra.mxu0 %v842
    %v913 = vpop.f32.mrf.mxu0
    %v914 = vadd.f32 0.0, %v913
    %v915 = vpop.f32.mrf.mxu0
    %916 = vmatprep.mubr.f32.mxu0 0.0
    %917 = vmatmul.mubr.f32.gmra.mxu0 %v845
    %v918 = vpop.f32.mrf.mxu0
    %v919 = vadd.f32 0.0, %v918
    %v920 = vpop.f32.mrf.mxu0
    %921 = vdwg.mxu0
    %v922 = vld [vmem:[%s27] sm:$0x1]
    %v924 = vlaneseq
    %v925 = vshrl.u32 %v924, 7
    %v926 = vsub.s32 0, %v925
    %v927 = vrot.slane %v922, %v926
    %929 = vmatprep.subr.mxu0 0.0
    %930 = vmatpush1.msra.mxu0 0.0
    %931 = vmatprep.subr.mxu0 0.0
    %932 = vmatpush1.msra.mxu0 0.0
    %933 = vmatprep.subr.mxu0 0.0
    %934 = vmatpush1.msra.mxu0 0.0
    %935 = vmatprep.subr.mxu0 0.0
    %936 = vmatpush1.msra.mxu0 0.0
    %937 = vmatprep.subr.mxu0 0.0
    %938 = vmatpush1.msra.mxu0 0.0
    %939 = vmatprep.subr.mxu0 0.0
    %940 = vmatpush1.msra.mxu0 0.0
    %941 = vmatprep.subr.mxu0 0.0
    %942 = vmatpush1.msra.mxu0 0.0
    %943 = vmatprep.subr.mxu0 0.0
    %944 = vmatpush1.msra.mxu0 0.0
    %945 = vmatprep.subr.mxu0 0.0
    %946 = vmatpush1.msra.mxu0 0.0
    %947 = vmatprep.subr.mxu0 0.0
    %948 = vmatpush1.msra.mxu0 0.0
    %949 = vmatprep.subr.mxu0 0.0
    %950 = vmatpush1.msra.mxu0 0.0
    %951 = vmatprep.subr.mxu0 0.0
    %952 = vmatpush1.msra.mxu0 0.0
    %953 = vmatprep.subr.mxu0 0.0
    %954 = vmatpush1.msra.mxu0 0.0
    %955 = vmatprep.subr.mxu0 0.0
    %956 = vmatpush1.msra.mxu0 0.0
    %957 = vmatprep.subr.mxu0 0.0
    %958 = vmatpush1.msra.mxu0 %v919
    %959 = vmatprep.subr.mxu0 0.0
    %960 = vmatpush1.msra.mxu0 %v914
    %961 = vmatprep.subr.mxu0 0.0
    %962 = vmatpush2.msra.mxu0 0.0
    %963 = vmatprep.subr.mxu0 0.0
    %964 = vmatpush2.msra.mxu0 0.0
    %965 = vmatprep.subr.mxu0 0.0
    %966 = vmatpush2.msra.mxu0 0.0
    %967 = vmatprep.subr.mxu0 0.0
    %968 = vmatpush2.msra.mxu0 0.0
    %969 = vmatprep.subr.mxu0 0.0
    %970 = vmatpush2.msra.mxu0 0.0
    %971 = vmatprep.subr.mxu0 0.0
    %972 = vmatpush2.msra.mxu0 0.0
    %973 = vmatprep.subr.mxu0 0.0
    %974 = vmatpush2.msra.mxu0 0.0
    %975 = vmatprep.subr.mxu0 0.0
    %976 = vmatpush2.msra.mxu0 0.0
    %977 = vmatprep.subr.mxu0 0.0
    %978 = vmatpush2.msra.mxu0 0.0
    %979 = vmatprep.subr.mxu0 0.0
    %980 = vmatpush2.msra.mxu0 0.0
    %981 = vmatprep.subr.mxu0 0.0
    %982 = vmatpush2.msra.mxu0 0.0
    %983 = vmatprep.subr.mxu0 0.0
    %984 = vmatpush2.msra.mxu0 0.0
    %985 = vmatprep.subr.mxu0 0.0
    %986 = vmatpush2.msra.mxu0 0.0
    %987 = vmatprep.subr.mxu0 0.0
    %988 = vmatpush2.msra.mxu0 0.0
    %989 = vmatprep.subr.mxu0 0.0
    %990 = vmatpush2.msra.mxu0 0.0
    %991 = vmatprep.subr.mxu0 0.0
    %992 = vmatpush2.msra.mxu0 0.0
    %993 = vmatprep.mubr.f32.mxu0 0.0
    %994 = vmatmul.mubr.f32.gmra.mxu0 %v400
    %v995 = vpop.f32.mrf.mxu0
    %v996 = vadd.f32 %v927, %v995
    %v997 = vpop.f32.mrf.mxu0
    %998 = vmatprep.mubr.f32.mxu0 0.0
    %999 = vmatmul.mubr.f32.gmra.mxu0 %v403
    %v1000 = vpop.f32.mrf.mxu0
    %v1001 = vadd.f32 %v927, %v1000
    %v1002 = vpop.f32.mrf.mxu0
    %1003 = vdwg.mxu0
    %v1004 = vadd.f32 %v996, %v829
    %v1005 = vadd.f32 %v1001, %v830
    %v1006 = vsel %vm490, %v1004, 0.0
    %v1007 = vrot.slane %v1006, 4
    %v1008 = vadd.f32 %v1006, %v1007
    %v1009 = vrot.slane %v1008, 2
    %v1010 = vadd.f32 %v1008, %v1009
    %v1011 = vrot.slane %v1010, 1
    %v1012 = vadd.f32 %v1010, %v1011
    %v1013 = vrcp.pop 8.0
    %v1014 = vmul.f32 %v1012, %v1013
    %v1015 = vsel %vm490, %v1005, 0.0
    %v1016 = vrot.slane %v1015, 4
    %v1017 = vadd.f32 %v1015, %v1016
    %v1018 = vrot.slane %v1017, 2
    %v1019 = vadd.f32 %v1017, %v1018
    %v1020 = vrot.slane %v1019, 1
    %v1021 = vadd.f32 %v1019, %v1020
    %v1022 = vmul.f32 %v1021, %v1013
    %vm1023 = vcmask 1040384
    %v1024 = vsel %vm1023, %v1014, %v1022
    %v1025 = vld [vmem:[#allocation5] sm:$0xff]
    %v1026 = vld [vmem:[#allocation5 + $0x8] sm:$0xff]
    %v1027 = vld [vmem:[%s7] sm:$0xff]
    %v1028 = vld [vmem:[%s7 + $0x8] sm:$0xff]
    %v1029 = vld [vmem:[#allocation8] sm:$0x3f]
    %vm1030 = vcmask 48128
    %v1032 = vsel %vm1030, %v1027, 0
    %v1035 = vsel %vm1030, %v1028, 0
    %vm1037 = vcmask 1045504
    %v1039 = vsel %vm1037, %v1029, 0
    %1041 = vmatprep.subr.mxu0 0.0
    %1042 = vmatpush1.msra.mxu0 0.0
    %1043 = vmatprep.subr.mxu0 0.0
    %1044 = vmatpush1.msra.mxu0 0.0
    %1045 = vmatprep.subr.mxu0 0.0
    %1046 = vmatpush1.msra.mxu0 0.0
    %1047 = vmatprep.subr.mxu0 0.0
    %1048 = vmatpush1.msra.mxu0 0.0
    %1049 = vmatprep.subr.mxu0 0.0
    %1050 = vmatpush1.msra.mxu0 0.0
    %1051 = vmatprep.subr.mxu0 0.0
    %1052 = vmatpush1.msra.mxu0 0.0
    %1053 = vmatprep.subr.mxu0 0.0
    %1054 = vmatpush1.msra.mxu0 0.0
    %1055 = vmatprep.subr.mxu0 0.0
    %1056 = vmatpush1.msra.mxu0 0.0
    %1057 = vmatprep.subr.mxu0 0.0
    %1058 = vmatpush1.msra.mxu0 0.0
    %1059 = vmatprep.subr.mxu0 0.0
    %1060 = vmatpush1.msra.mxu0 0.0
    %1061 = vmatprep.subr.mxu0 0.0
    %1062 = vmatpush1.msra.mxu0 0.0
    %1063 = vmatprep.subr.mxu0 0.0
    %1064 = vmatpush1.msra.mxu0 0.0
    %1065 = vmatprep.subr.mxu0 0.0
    %1066 = vmatpush1.msra.mxu0 0.0
    %1067 = vmatprep.subr.mxu0 0.0
    %1068 = vmatpush1.msra.mxu0 0.0
    %1069 = vmatprep.subr.mxu0 0.0
    %1070 = vmatpush1.msra.mxu0 0.0
    %1071 = vmatprep.subr.mxu0 0.0
    %1072 = vmatpush1.msra.mxu0 %v1039
    %1073 = vmatprep.subr.mxu0 0.0
    %1074 = vmatpush2.msra.mxu0 0.0
    %1075 = vmatprep.subr.mxu0 0.0
    %1076 = vmatpush2.msra.mxu0 0.0
    %1077 = vmatprep.subr.mxu0 0.0
    %1078 = vmatpush2.msra.mxu0 0.0
    %1079 = vmatprep.subr.mxu0 0.0
    %1080 = vmatpush2.msra.mxu0 0.0
    %1081 = vmatprep.subr.mxu0 0.0
    %1082 = vmatpush2.msra.mxu0 0.0
    %1083 = vmatprep.subr.mxu0 0.0
    %1084 = vmatpush2.msra.mxu0 0.0
    %1085 = vmatprep.subr.mxu0 0.0
    %1086 = vmatpush2.msra.mxu0 0.0
    %1087 = vmatprep.subr.mxu0 0.0
    %1088 = vmatpush2.msra.mxu0 0.0
    %1089 = vmatprep.subr.mxu0 0.0
    %1090 = vmatpush2.msra.mxu0 0.0
    %1091 = vmatprep.subr.mxu0 0.0
    %1092 = vmatpush2.msra.mxu0 0.0
    %1093 = vmatprep.subr.mxu0 0.0
    %1094 = vmatpush2.msra.mxu0 0.0
    %1095 = vmatprep.subr.mxu0 0.0
    %1096 = vmatpush2.msra.mxu0 0.0
    %1097 = vmatprep.subr.mxu0 0.0
    %1098 = vmatpush2.msra.mxu0 0.0
    %1099 = vmatprep.subr.mxu0 0.0
    %1100 = vmatpush2.msra.mxu0 0.0
    %1101 = vmatprep.subr.mxu0 0.0
    %1102 = vmatpush2.msra.mxu0 0.0
    %1103 = vmatprep.subr.mxu0 0.0
    %1104 = vmatpush2.msra.mxu0 0.0
    %1105 = vmatprep.mubr.f32.mxu0 0.0
    %1106 = vmatmul.mubr.f32.gmra.mxu0 %v1032
    %v1107 = vpop.f32.mrf.mxu0
    %v1108 = vadd.f32 0.0, %v1107
    %v1109 = vpop.f32.mrf.mxu0
    %1110 = vmatprep.mubr.f32.mxu0 0.0
    %1111 = vmatmul.mubr.f32.gmra.mxu0 %v1035
    %v1112 = vpop.f32.mrf.mxu0
    %v1113 = vadd.f32 0.0, %v1112
    %v1114 = vpop.f32.mrf.mxu0
    %1115 = vdwg.mxu0
    %v1116 = vld [vmem:[#allocation10] sm:$0x1]
    %v1118 = vlaneseq
    %v1119 = vshrl.u32 %v1118, 7
    %v1120 = vsub.s32 0, %v1119
    %v1121 = vrot.slane %v1116, %v1120
    %v1124 = vsel %vm398, %v1025, 0
    %v1127 = vsel %vm398, %v1026, 0
    %1129 = vmatprep.subr.mxu0 0.0
    %1130 = vmatpush1.msra.mxu0 0.0
    %1131 = vmatprep.subr.mxu0 0.0
    %1132 = vmatpush1.msra.mxu0 0.0
    %1133 = vmatprep.subr.mxu0 0.0
    %1134 = vmatpush1.msra.mxu0 0.0
    %1135 = vmatprep.subr.mxu0 0.0
    %1136 = vmatpush1.msra.mxu0 0.0
    %1137 = vmatprep.subr.mxu0 0.0
    %1138 = vmatpush1.msra.mxu0 0.0
    %1139 = vmatprep.subr.mxu0 0.0
    %1140 = vmatpush1.msra.mxu0 0.0
    %1141 = vmatprep.subr.mxu0 0.0
    %1142 = vmatpush1.msra.mxu0 0.0
    %1143 = vmatprep.subr.mxu0 0.0
    %1144 = vmatpush1.msra.mxu0 0.0
    %1145 = vmatprep.subr.mxu0 0.0
    %1146 = vmatpush1.msra.mxu0 0.0
    %1147 = vmatprep.subr.mxu0 0.0
    %1148 = vmatpush1.msra.mxu0 0.0
    %1149 = vmatprep.subr.mxu0 0.0
    %1150 = vmatpush1.msra.mxu0 0.0
    %1151 = vmatprep.subr.mxu0 0.0
    %1152 = vmatpush1.msra.mxu0 0.0
    %1153 = vmatprep.subr.mxu0 0.0
    %1154 = vmatpush1.msra.mxu0 0.0
    %1155 = vmatprep.subr.mxu0 0.0
    %1156 = vmatpush1.msra.mxu0 0.0
    %1157 = vmatprep.subr.mxu0 0.0
    %1158 = vmatpush1.msra.mxu0 %v1113
    %1159 = vmatprep.subr.mxu0 0.0
    %1160 = vmatpush1.msra.mxu0 %v1108
    %1161 = vmatprep.subr.mxu0 0.0
    %1162 = vmatpush2.msra.mxu0 0.0
    %1163 = vmatprep.subr.mxu0 0.0
    %1164 = vmatpush2.msra.mxu0 0.0
    %1165 = vmatprep.subr.mxu0 0.0
    %1166 = vmatpush2.msra.mxu0 0.0
    %1167 = vmatprep.subr.mxu0 0.0
    %1168 = vmatpush2.msra.mxu0 0.0
    %1169 = vmatprep.subr.mxu0 0.0
    %1170 = vmatpush2.msra.mxu0 0.0
    %1171 = vmatprep.subr.mxu0 0.0
    %1172 = vmatpush2.msra.mxu0 0.0
    %1173 = vmatprep.subr.mxu0 0.0
    %1174 = vmatpush2.msra.mxu0 0.0
    %1175 = vmatprep.subr.mxu0 0.0
    %1176 = vmatpush2.msra.mxu0 0.0
    %1177 = vmatprep.subr.mxu0 0.0
    %1178 = vmatpush2.msra.mxu0 0.0
    %1179 = vmatprep.subr.mxu0 0.0
    %1180 = vmatpush2.msra.mxu0 0.0
    %1181 = vmatprep.subr.mxu0 0.0
    %1182 = vmatpush2.msra.mxu0 0.0
    %1183 = vmatprep.subr.mxu0 0.0
    %1184 = vmatpush2.msra.mxu0 0.0
    %1185 = vmatprep.subr.mxu0 0.0
    %1186 = vmatpush2.msra.mxu0 0.0
    %1187 = vmatprep.subr.mxu0 0.0
    %1188 = vmatpush2.msra.mxu0 0.0
    %1189 = vmatprep.subr.mxu0 0.0
    %1190 = vmatpush2.msra.mxu0 0.0
    %1191 = vmatprep.subr.mxu0 0.0
    %1192 = vmatpush2.msra.mxu0 0.0
    %1193 = vmatprep.mubr.f32.mxu0 0.0
    %1194 = vmatmul.mubr.f32.gmra.mxu0 %v1124
    %v1195 = vpop.f32.mrf.mxu0
    %v1196 = vadd.f32 %v1121, %v1195
    %v1197 = vpop.f32.mrf.mxu0
    %1198 = vmatprep.mubr.f32.mxu0 0.0
    %1199 = vmatmul.mubr.f32.gmra.mxu0 %v1127
    %v1200 = vpop.f32.mrf.mxu0
    %v1201 = vadd.f32 %v1121, %v1200
    %v1202 = vpop.f32.mrf.mxu0
    %1203 = vdwg.mxu0
    %vm1204 = vcmp.ge.f32.partialorder %v1196, 0.0
    %vm1205 = vcmp.ge.f32.partialorder %v1201, 0.0
    %v1206 = vmul.f32 %v1196, 0.2
    %v1207 = vmul.f32 %v1201, 0.2
    %v1208 = vsel %vm1204, %v1196, %v1206
    %v1209 = vsel %vm1205, %v1201, %v1207
    %v1210 = vld [vmem:[%s33] sm:$0xff]
    %v1211 = vld [vmem:[%s33 + $0x8] sm:$0xff]
    %v1212 = vld [vmem:[%s33 + $0x10] sm:$0xff]
    %v1213 = vld [vmem:[%s33 + $0x18] sm:$0xff]
    %v1215 = vsel %vm490, %v1208, 0
    %v1218 = vsel %vm490, %v1209, 0
    %1220 = vmatprep.subr.mxu0 0.0
    %1221 = vmatpush1.msra.mxu0 0.0
    %1222 = vmatprep.subr.mxu0 0.0
    %1223 = vmatpush1.msra.mxu0 0.0
    %1224 = vmatprep.subr.mxu0 0.0
    %1225 = vmatpush1.msra.mxu0 0.0
    %1226 = vmatprep.subr.mxu0 0.0
    %1227 = vmatpush1.msra.mxu0 0.0
    %1228 = vmatprep.subr.mxu0 0.0
    %1229 = vmatpush1.msra.mxu0 0.0
    %1230 = vmatprep.subr.mxu0 0.0
    %1231 = vmatpush1.msra.mxu0 0.0
    %1232 = vmatprep.subr.mxu0 0.0
    %1233 = vmatpush1.msra.mxu0 0.0
    %1234 = vmatprep.subr.mxu0 0.0
    %1235 = vmatpush1.msra.mxu0 0.0
    %1236 = vmatprep.subr.mxu0 0.0
    %1237 = vmatpush1.msra.mxu0 0.0
    %1238 = vmatprep.subr.mxu0 0.0
    %1239 = vmatpush1.msra.mxu0 0.0
    %1240 = vmatprep.subr.mxu0 0.0
    %1241 = vmatpush1.msra.mxu0 0.0
    %1242 = vmatprep.subr.mxu0 0.0
    %1243 = vmatpush1.msra.mxu0 0.0
    %1244 = vmatprep.subr.mxu0 0.0
    %1245 = vmatpush1.msra.mxu0 %v1213
    %1246 = vmatprep.subr.mxu0 0.0
    %1247 = vmatpush1.msra.mxu0 %v1212
    %1248 = vmatprep.subr.mxu0 0.0
    %1249 = vmatpush1.msra.mxu0 %v1211
    %1250 = vmatprep.subr.mxu0 0.0
    %1251 = vmatpush1.msra.mxu0 %v1210
    %1252 = vmatprep.subr.mxu0 0.0
    %1253 = vmatpush2.msra.mxu0 0.0
    %1254 = vmatprep.subr.mxu0 0.0
    %1255 = vmatpush2.msra.mxu0 0.0
    %1256 = vmatprep.subr.mxu0 0.0
    %1257 = vmatpush2.msra.mxu0 0.0
    %1258 = vmatprep.subr.mxu0 0.0
    %1259 = vmatpush2.msra.mxu0 0.0
    %1260 = vmatprep.subr.mxu0 0.0
    %1261 = vmatpush2.msra.mxu0 0.0
    %1262 = vmatprep.subr.mxu0 0.0
    %1263 = vmatpush2.msra.mxu0 0.0
    %1264 = vmatprep.subr.mxu0 0.0
    %1265 = vmatpush2.msra.mxu0 0.0
    %1266 = vmatprep.subr.mxu0 0.0
    %1267 = vmatpush2.msra.mxu0 0.0
    %1268 = vmatprep.subr.mxu0 0.0
    %1269 = vmatpush2.msra.mxu0 0.0
    %1270 = vmatprep.subr.mxu0 0.0
    %1271 = vmatpush2.msra.mxu0 0.0
    %1272 = vmatprep.subr.mxu0 0.0
    %1273 = vmatpush2.msra.mxu0 0.0
    %1274 = vmatprep.subr.mxu0 0.0
    %1275 = vmatpush2.msra.mxu0 0.0
    %1276 = vmatprep.subr.mxu0 0.0
    %1277 = vmatpush2.msra.mxu0 0.0
    %1278 = vmatprep.subr.mxu0 0.0
    %1279 = vmatpush2.msra.mxu0 0.0
    %1280 = vmatprep.subr.mxu0 0.0
    %1281 = vmatpush2.msra.mxu0 0.0
    %1282 = vmatprep.subr.mxu0 0.0
    %1283 = vmatpush2.msra.mxu0 0.0
    %1284 = vmatprep.mubr.f32.mxu0 0.0
    %1285 = vmatmul.mubr.f32.gmra.mxu0 %v1215
    %v1286 = vpop.f32.mrf.mxu0
    %v1287 = vadd.f32 0.0, %v1286
    %v1288 = vpop.f32.mrf.mxu0
    %1289 = vmatprep.mubr.f32.mxu0 0.0
    %1290 = vmatmul.mubr.f32.gmra.mxu0 %v1218
    %v1291 = vpop.f32.mrf.mxu0
    %v1292 = vadd.f32 0.0, %v1291
    %v1293 = vpop.f32.mrf.mxu0
    %1294 = vdwg.mxu0
    %v1295 = vld [vmem:[#allocation11] sm:$0x1]
    %v1297 = vlaneseq
    %v1298 = vshrl.u32 %v1297, 7
    %v1299 = vsub.s32 0, %v1298
    %v1300 = vrot.slane %v1295, %v1299
    %1302 = vmatprep.subr.mxu0 0.0
    %1303 = vmatpush1.msra.mxu0 0.0
    %1304 = vmatprep.subr.mxu0 0.0
    %1305 = vmatpush1.msra.mxu0 0.0
    %1306 = vmatprep.subr.mxu0 0.0
    %1307 = vmatpush1.msra.mxu0 0.0
    %1308 = vmatprep.subr.mxu0 0.0
    %1309 = vmatpush1.msra.mxu0 0.0
    %1310 = vmatprep.subr.mxu0 0.0
    %1311 = vmatpush1.msra.mxu0 0.0
    %1312 = vmatprep.subr.mxu0 0.0
    %1313 = vmatpush1.msra.mxu0 0.0
    %1314 = vmatprep.subr.mxu0 0.0
    %1315 = vmatpush1.msra.mxu0 0.0
    %1316 = vmatprep.subr.mxu0 0.0
    %1317 = vmatpush1.msra.mxu0 0.0
    %1318 = vmatprep.subr.mxu0 0.0
    %1319 = vmatpush1.msra.mxu0 0.0
    %1320 = vmatprep.subr.mxu0 0.0
    %1321 = vmatpush1.msra.mxu0 0.0
    %1322 = vmatprep.subr.mxu0 0.0
    %1323 = vmatpush1.msra.mxu0 0.0
    %1324 = vmatprep.subr.mxu0 0.0
    %1325 = vmatpush1.msra.mxu0 0.0
    %1326 = vmatprep.subr.mxu0 0.0
    %1327 = vmatpush1.msra.mxu0 0.0
    %1328 = vmatprep.subr.mxu0 0.0
    %1329 = vmatpush1.msra.mxu0 0.0
    %1330 = vmatprep.subr.mxu0 0.0
    %1331 = vmatpush1.msra.mxu0 %v1292
    %1332 = vmatprep.subr.mxu0 0.0
    %1333 = vmatpush1.msra.mxu0 %v1287
    %1334 = vmatprep.subr.mxu0 0.0
    %1335 = vmatpush2.msra.mxu0 0.0
    %1336 = vmatprep.subr.mxu0 0.0
    %1337 = vmatpush2.msra.mxu0 0.0
    %1338 = vmatprep.subr.mxu0 0.0
    %1339 = vmatpush2.msra.mxu0 0.0
    %1340 = vmatprep.subr.mxu0 0.0
    %1341 = vmatpush2.msra.mxu0 0.0
    %1342 = vmatprep.subr.mxu0 0.0
    %1343 = vmatpush2.msra.mxu0 0.0
    %1344 = vmatprep.subr.mxu0 0.0
    %1345 = vmatpush2.msra.mxu0 0.0
    %1346 = vmatprep.subr.mxu0 0.0
    %1347 = vmatpush2.msra.mxu0 0.0
    %1348 = vmatprep.subr.mxu0 0.0
    %1349 = vmatpush2.msra.mxu0 0.0
    %1350 = vmatprep.subr.mxu0 0.0
    %1351 = vmatpush2.msra.mxu0 0.0
    %1352 = vmatprep.subr.mxu0 0.0
    %1353 = vmatpush2.msra.mxu0 0.0
    %1354 = vmatprep.subr.mxu0 0.0
    %1355 = vmatpush2.msra.mxu0 0.0
    %1356 = vmatprep.subr.mxu0 0.0
    %1357 = vmatpush2.msra.mxu0 0.0
    %1358 = vmatprep.subr.mxu0 0.0
    %1359 = vmatpush2.msra.mxu0 0.0
    %1360 = vmatprep.subr.mxu0 0.0
    %1361 = vmatpush2.msra.mxu0 0.0
    %1362 = vmatprep.subr.mxu0 0.0
    %1363 = vmatpush2.msra.mxu0 0.0
    %1364 = vmatprep.subr.mxu0 0.0
    %1365 = vmatpush2.msra.mxu0 0.0
    %1366 = vmatprep.mubr.f32.mxu0 0.0
    %1367 = vmatmul.mubr.f32.gmra.mxu0 %v1124
    %v1368 = vpop.f32.mrf.mxu0
    %v1369 = vadd.f32 %v1300, %v1368
    %v1370 = vpop.f32.mrf.mxu0
    %1371 = vmatprep.mubr.f32.mxu0 0.0
    %1372 = vmatmul.mubr.f32.gmra.mxu0 %v1127
    %v1373 = vpop.f32.mrf.mxu0
    %v1374 = vadd.f32 %v1300, %v1373
    %v1375 = vpop.f32.mrf.mxu0
    %1376 = vdwg.mxu0
    %v1377 = vadd.f32 %v1369, %v1196
    %v1378 = vadd.f32 %v1374, %v1201
    %vm1379 = vcmp.ge.f32.partialorder %v1377, 0.0
    %vm1380 = vcmp.ge.f32.partialorder %v1378, 0.0
    %v1381 = vmul.f32 %v1377, 0.2
    %v1382 = vmul.f32 %v1378, 0.2
    %v1383 = vsel %vm1379, %v1377, %v1381
    %v1384 = vsel %vm1380, %v1378, %v1382
    %v1385 = vld [vmem:[%s37] sm:$0xff]
    %v1386 = vld [vmem:[%s37 + $0x8] sm:$0xff]
    %v1387 = vld [vmem:[%s37 + $0x10] sm:$0xff]
    %v1388 = vld [vmem:[%s37 + $0x18] sm:$0xff]
    %v1390 = vsel %vm490, %v1383, 0
    %v1393 = vsel %vm490, %v1384, 0
    %1395 = vmatprep.subr.mxu0 0.0
    %1396 = vmatpush1.msra.mxu0 0.0
    %1397 = vmatprep.subr.mxu0 0.0
    %1398 = vmatpush1.msra.mxu0 0.0
    %1399 = vmatprep.subr.mxu0 0.0
    %1400 = vmatpush1.msra.mxu0 0.0
    %1401 = vmatprep.subr.mxu0 0.0
    %1402 = vmatpush1.msra.mxu0 0.0
    %1403 = vmatprep.subr.mxu0 0.0
    %1404 = vmatpush1.msra.mxu0 0.0
    %1405 = vmatprep.subr.mxu0 0.0
    %1406 = vmatpush1.msra.mxu0 0.0
    %1407 = vmatprep.subr.mxu0 0.0
    %1408 = vmatpush1.msra.mxu0 0.0
    %1409 = vmatprep.subr.mxu0 0.0
    %1410 = vmatpush1.msra.mxu0 0.0
    %1411 = vmatprep.subr.mxu0 0.0
    %1412 = vmatpush1.msra.mxu0 0.0
    %1413 = vmatprep.subr.mxu0 0.0
    %1414 = vmatpush1.msra.mxu0 0.0
    %1415 = vmatprep.subr.mxu0 0.0
    %1416 = vmatpush1.msra.mxu0 0.0
    %1417 = vmatprep.subr.mxu0 0.0
    %1418 = vmatpush1.msra.mxu0 0.0
    %1419 = vmatprep.subr.mxu0 0.0
    %1420 = vmatpush1.msra.mxu0 %v1388
    %1421 = vmatprep.subr.mxu0 0.0
    %1422 = vmatpush1.msra.mxu0 %v1387
    %1423 = vmatprep.subr.mxu0 0.0
    %1424 = vmatpush1.msra.mxu0 %v1386
    %1425 = vmatprep.subr.mxu0 0.0
    %1426 = vmatpush1.msra.mxu0 %v1385
    %1427 = vmatprep.subr.mxu0 0.0
    %1428 = vmatpush2.msra.mxu0 0.0
    %1429 = vmatprep.subr.mxu0 0.0
    %1430 = vmatpush2.msra.mxu0 0.0
    %1431 = vmatprep.subr.mxu0 0.0
    %1432 = vmatpush2.msra.mxu0 0.0
    %1433 = vmatprep.subr.mxu0 0.0
    %1434 = vmatpush2.msra.mxu0 0.0
    %1435 = vmatprep.subr.mxu0 0.0
    %1436 = vmatpush2.msra.mxu0 0.0
    %1437 = vmatprep.subr.mxu0 0.0
    %1438 = vmatpush2.msra.mxu0 0.0
    %1439 = vmatprep.subr.mxu0 0.0
    %1440 = vmatpush2.msra.mxu0 0.0
    %1441 = vmatprep.subr.mxu0 0.0
    %1442 = vmatpush2.msra.mxu0 0.0
    %1443 = vmatprep.subr.mxu0 0.0
    %1444 = vmatpush2.msra.mxu0 0.0
    %1445 = vmatprep.subr.mxu0 0.0
    %1446 = vmatpush2.msra.mxu0 0.0
    %1447 = vmatprep.subr.mxu0 0.0
    %1448 = vmatpush2.msra.mxu0 0.0
    %1449 = vmatprep.subr.mxu0 0.0
    %1450 = vmatpush2.msra.mxu0 0.0
    %1451 = vmatprep.subr.mxu0 0.0
    %1452 = vmatpush2.msra.mxu0 0.0
    %1453 = vmatprep.subr.mxu0 0.0
    %1454 = vmatpush2.msra.mxu0 0.0
    %1455 = vmatprep.subr.mxu0 0.0
    %1456 = vmatpush2.msra.mxu0 0.0
    %1457 = vmatprep.subr.mxu0 0.0
    %1458 = vmatpush2.msra.mxu0 0.0
    %1459 = vmatprep.mubr.f32.mxu0 0.0
    %1460 = vmatmul.mubr.f32.gmra.mxu0 %v1390
    %v1461 = vpop.f32.mrf.mxu0
    %v1462 = vadd.f32 0.0, %v1461
    %v1463 = vpop.f32.mrf.mxu0
    %1464 = vmatprep.mubr.f32.mxu0 0.0
    %1465 = vmatmul.mubr.f32.gmra.mxu0 %v1393
    %v1466 = vpop.f32.mrf.mxu0
    %v1467 = vadd.f32 0.0, %v1466
    %v1468 = vpop.f32.mrf.mxu0
    %1469 = vdwg.mxu0
    %v1470 = vld [vmem:[#allocation13] sm:$0x1]
    %v1472 = vlaneseq
    %v1473 = vshrl.u32 %v1472, 7
    %v1474 = vsub.s32 0, %v1473
    %v1475 = vrot.slane %v1470, %v1474
    %1477 = vmatprep.subr.mxu0 0.0
    %1478 = vmatpush1.msra.mxu0 0.0
    %1479 = vmatprep.subr.mxu0 0.0
    %1480 = vmatpush1.msra.mxu0 0.0
    %1481 = vmatprep.subr.mxu0 0.0
    %1482 = vmatpush1.msra.mxu0 0.0
    %1483 = vmatprep.subr.mxu0 0.0
    %1484 = vmatpush1.msra.mxu0 0.0
    %1485 = vmatprep.subr.mxu0 0.0
    %1486 = vmatpush1.msra.mxu0 0.0
    %1487 = vmatprep.subr.mxu0 0.0
    %1488 = vmatpush1.msra.mxu0 0.0
    %1489 = vmatprep.subr.mxu0 0.0
    %1490 = vmatpush1.msra.mxu0 0.0
    %1491 = vmatprep.subr.mxu0 0.0
    %1492 = vmatpush1.msra.mxu0 0.0
    %1493 = vmatprep.subr.mxu0 0.0
    %1494 = vmatpush1.msra.mxu0 0.0
    %1495 = vmatprep.subr.mxu0 0.0
    %1496 = vmatpush1.msra.mxu0 0.0
    %1497 = vmatprep.subr.mxu0 0.0
    %1498 = vmatpush1.msra.mxu0 0.0
    %1499 = vmatprep.subr.mxu0 0.0
    %1500 = vmatpush1.msra.mxu0 0.0
    %1501 = vmatprep.subr.mxu0 0.0
    %1502 = vmatpush1.msra.mxu0 0.0
    %1503 = vmatprep.subr.mxu0 0.0
    %1504 = vmatpush1.msra.mxu0 0.0
    %1505 = vmatprep.subr.mxu0 0.0
    %1506 = vmatpush1.msra.mxu0 %v1467
    %1507 = vmatprep.subr.mxu0 0.0
    %1508 = vmatpush1.msra.mxu0 %v1462
    %1509 = vmatprep.subr.mxu0 0.0
    %1510 = vmatpush2.msra.mxu0 0.0
    %1511 = vmatprep.subr.mxu0 0.0
    %1512 = vmatpush2.msra.mxu0 0.0
    %1513 = vmatprep.subr.mxu0 0.0
    %1514 = vmatpush2.msra.mxu0 0.0
    %1515 = vmatprep.subr.mxu0 0.0
    %1516 = vmatpush2.msra.mxu0 0.0
    %1517 = vmatprep.subr.mxu0 0.0
    %1518 = vmatpush2.msra.mxu0 0.0
    %1519 = vmatprep.subr.mxu0 0.0
    %1520 = vmatpush2.msra.mxu0 0.0
    %1521 = vmatprep.subr.mxu0 0.0
    %1522 = vmatpush2.msra.mxu0 0.0
    %1523 = vmatprep.subr.mxu0 0.0
    %1524 = vmatpush2.msra.mxu0 0.0
    %1525 = vmatprep.subr.mxu0 0.0
    %1526 = vmatpush2.msra.mxu0 0.0
    %1527 = vmatprep.subr.mxu0 0.0
    %1528 = vmatpush2.msra.mxu0 0.0
    %1529 = vmatprep.subr.mxu0 0.0
    %1530 = vmatpush2.msra.mxu0 0.0
    %1531 = vmatprep.subr.mxu0 0.0
    %1532 = vmatpush2.msra.mxu0 0.0
    %1533 = vmatprep.subr.mxu0 0.0
    %1534 = vmatpush2.msra.mxu0 0.0
    %1535 = vmatprep.subr.mxu0 0.0
    %1536 = vmatpush2.msra.mxu0 0.0
    %1537 = vmatprep.subr.mxu0 0.0
    %1538 = vmatpush2.msra.mxu0 0.0
    %1539 = vmatprep.subr.mxu0 0.0
    %1540 = vmatpush2.msra.mxu0 0.0
    %1541 = vmatprep.mubr.f32.mxu0 0.0
    %1542 = vmatmul.mubr.f32.gmra.mxu0 %v1124
    %v1543 = vpop.f32.mrf.mxu0
    %v1544 = vadd.f32 %v1475, %v1543
    %v1545 = vpop.f32.mrf.mxu0
    %1546 = vmatprep.mubr.f32.mxu0 0.0
    %1547 = vmatmul.mubr.f32.gmra.mxu0 %v1127
    %v1548 = vpop.f32.mrf.mxu0
    %v1549 = vadd.f32 %v1475, %v1548
    %v1550 = vpop.f32.mrf.mxu0
    %1551 = vdwg.mxu0
    %v1552 = vadd.f32 %v1544, %v1377
    %v1553 = vadd.f32 %v1549, %v1378
    %vm1554 = vcmp.ge.f32.partialorder %v1552, 0.0
    %vm1555 = vcmp.ge.f32.partialorder %v1553, 0.0
    %v1556 = vmul.f32 %v1552, 0.2
    %v1557 = vmul.f32 %v1553, 0.2
    %v1558 = vsel %vm1554, %v1552, %v1556
    %v1559 = vsel %vm1555, %v1553, %v1557
    %v1560 = vld [vmem:[%s41] sm:$0xff]
    %v1561 = vld [vmem:[%s41 + $0x8] sm:$0xff]
    %v1562 = vld [vmem:[%s41 + $0x10] sm:$0xff]
    %v1563 = vld [vmem:[%s41 + $0x18] sm:$0xff]
    %v1565 = vsel %vm490, %v1558, 0
    %v1568 = vsel %vm490, %v1559, 0
    %1570 = vmatprep.subr.mxu0 0.0
    %1571 = vmatpush1.msra.mxu0 0.0
    %1572 = vmatprep.subr.mxu0 0.0
    %1573 = vmatpush1.msra.mxu0 0.0
    %1574 = vmatprep.subr.mxu0 0.0
    %1575 = vmatpush1.msra.mxu0 0.0
    %1576 = vmatprep.subr.mxu0 0.0
    %1577 = vmatpush1.msra.mxu0 0.0
    %1578 = vmatprep.subr.mxu0 0.0
    %1579 = vmatpush1.msra.mxu0 0.0
    %1580 = vmatprep.subr.mxu0 0.0
    %1581 = vmatpush1.msra.mxu0 0.0
    %1582 = vmatprep.subr.mxu0 0.0
    %1583 = vmatpush1.msra.mxu0 0.0
    %1584 = vmatprep.subr.mxu0 0.0
    %1585 = vmatpush1.msra.mxu0 0.0
    %1586 = vmatprep.subr.mxu0 0.0
    %1587 = vmatpush1.msra.mxu0 0.0
    %1588 = vmatprep.subr.mxu0 0.0
    %1589 = vmatpush1.msra.mxu0 0.0
    %1590 = vmatprep.subr.mxu0 0.0
    %1591 = vmatpush1.msra.mxu0 0.0
    %1592 = vmatprep.subr.mxu0 0.0
    %1593 = vmatpush1.msra.mxu0 0.0
    %1594 = vmatprep.subr.mxu0 0.0
    %1595 = vmatpush1.msra.mxu0 %v1563
    %1596 = vmatprep.subr.mxu0 0.0
    %1597 = vmatpush1.msra.mxu0 %v1562
    %1598 = vmatprep.subr.mxu0 0.0
    %1599 = vmatpush1.msra.mxu0 %v1561
    %1600 = vmatprep.subr.mxu0 0.0
    %1601 = vmatpush1.msra.mxu0 %v1560
    %1602 = vmatprep.subr.mxu0 0.0
    %1603 = vmatpush2.msra.mxu0 0.0
    %1604 = vmatprep.subr.mxu0 0.0
    %1605 = vmatpush2.msra.mxu0 0.0
    %1606 = vmatprep.subr.mxu0 0.0
    %1607 = vmatpush2.msra.mxu0 0.0
    %1608 = vmatprep.subr.mxu0 0.0
    %1609 = vmatpush2.msra.mxu0 0.0
    %1610 = vmatprep.subr.mxu0 0.0
    %1611 = vmatpush2.msra.mxu0 0.0
    %1612 = vmatprep.subr.mxu0 0.0
    %1613 = vmatpush2.msra.mxu0 0.0
    %1614 = vmatprep.subr.mxu0 0.0
    %1615 = vmatpush2.msra.mxu0 0.0
    %1616 = vmatprep.subr.mxu0 0.0
    %1617 = vmatpush2.msra.mxu0 0.0
    %1618 = vmatprep.subr.mxu0 0.0
    %1619 = vmatpush2.msra.mxu0 0.0
    %1620 = vmatprep.subr.mxu0 0.0
    %1621 = vmatpush2.msra.mxu0 0.0
    %1622 = vmatprep.subr.mxu0 0.0
    %1623 = vmatpush2.msra.mxu0 0.0
    %1624 = vmatprep.subr.mxu0 0.0
    %1625 = vmatpush2.msra.mxu0 0.0
    %1626 = vmatprep.subr.mxu0 0.0
    %1627 = vmatpush2.msra.mxu0 0.0
    %1628 = vmatprep.subr.mxu0 0.0
    %1629 = vmatpush2.msra.mxu0 0.0
    %1630 = vmatprep.subr.mxu0 0.0
    %1631 = vmatpush2.msra.mxu0 0.0
    %1632 = vmatprep.subr.mxu0 0.0
    %1633 = vmatpush2.msra.mxu0 0.0
    %1634 = vmatprep.mubr.f32.mxu0 0.0
    %1635 = vmatmul.mubr.f32.gmra.mxu0 %v1565
    %v1636 = vpop.f32.mrf.mxu0
    %v1637 = vadd.f32 0.0, %v1636
    %v1638 = vpop.f32.mrf.mxu0
    %1639 = vmatprep.mubr.f32.mxu0 0.0
    %1640 = vmatmul.mubr.f32.gmra.mxu0 %v1568
    %v1641 = vpop.f32.mrf.mxu0
    %v1642 = vadd.f32 0.0, %v1641
    %v1643 = vpop.f32.mrf.mxu0
    %1644 = vdwg.mxu0
    %v1645 = vld [vmem:[#allocation14] sm:$0x1]
    %v1647 = vlaneseq
    %v1648 = vshrl.u32 %v1647, 7
    %v1649 = vsub.s32 0, %v1648
    %v1650 = vrot.slane %v1645, %v1649
    %1652 = vmatprep.subr.mxu0 0.0
    %1653 = vmatpush1.msra.mxu0 0.0
    %1654 = vmatprep.subr.mxu0 0.0
    %1655 = vmatpush1.msra.mxu0 0.0
    %1656 = vmatprep.subr.mxu0 0.0
    %1657 = vmatpush1.msra.mxu0 0.0
    %1658 = vmatprep.subr.mxu0 0.0
    %1659 = vmatpush1.msra.mxu0 0.0
    %1660 = vmatprep.subr.mxu0 0.0
    %1661 = vmatpush1.msra.mxu0 0.0
    %1662 = vmatprep.subr.mxu0 0.0
    %1663 = vmatpush1.msra.mxu0 0.0
    %1664 = vmatprep.subr.mxu0 0.0
    %1665 = vmatpush1.msra.mxu0 0.0
    %1666 = vmatprep.subr.mxu0 0.0
    %1667 = vmatpush1.msra.mxu0 0.0
    %1668 = vmatprep.subr.mxu0 0.0
    %1669 = vmatpush1.msra.mxu0 0.0
    %1670 = vmatprep.subr.mxu0 0.0
    %1671 = vmatpush1.msra.mxu0 0.0
    %1672 = vmatprep.subr.mxu0 0.0
    %1673 = vmatpush1.msra.mxu0 0.0
    %1674 = vmatprep.subr.mxu0 0.0
    %1675 = vmatpush1.msra.mxu0 0.0
    %1676 = vmatprep.subr.mxu0 0.0
    %1677 = vmatpush1.msra.mxu0 0.0
    %1678 = vmatprep.subr.mxu0 0.0
    %1679 = vmatpush1.msra.mxu0 0.0
    %1680 = vmatprep.subr.mxu0 0.0
    %1681 = vmatpush1.msra.mxu0 %v1642
    %1682 = vmatprep.subr.mxu0 0.0
    %1683 = vmatpush1.msra.mxu0 %v1637
    %1684 = vmatprep.subr.mxu0 0.0
    %1685 = vmatpush2.msra.mxu0 0.0
    %1686 = vmatprep.subr.mxu0 0.0
    %1687 = vmatpush2.msra.mxu0 0.0
    %1688 = vmatprep.subr.mxu0 0.0
    %1689 = vmatpush2.msra.mxu0 0.0
    %1690 = vmatprep.subr.mxu0 0.0
    %1691 = vmatpush2.msra.mxu0 0.0
    %1692 = vmatprep.subr.mxu0 0.0
    %1693 = vmatpush2.msra.mxu0 0.0
    %1694 = vmatprep.subr.mxu0 0.0
    %1695 = vmatpush2.msra.mxu0 0.0
    %1696 = vmatprep.subr.mxu0 0.0
    %1697 = vmatpush2.msra.mxu0 0.0
    %1698 = vmatprep.subr.mxu0 0.0
    %1699 = vmatpush2.msra.mxu0 0.0
    %1700 = vmatprep.subr.mxu0 0.0
    %1701 = vmatpush2.msra.mxu0 0.0
    %1702 = vmatprep.subr.mxu0 0.0
    %1703 = vmatpush2.msra.mxu0 0.0
    %1704 = vmatprep.subr.mxu0 0.0
    %1705 = vmatpush2.msra.mxu0 0.0
    %1706 = vmatprep.subr.mxu0 0.0
    %1707 = vmatpush2.msra.mxu0 0.0
    %1708 = vmatprep.subr.mxu0 0.0
    %1709 = vmatpush2.msra.mxu0 0.0
    %1710 = vmatprep.subr.mxu0 0.0
    %1711 = vmatpush2.msra.mxu0 0.0
    %1712 = vmatprep.subr.mxu0 0.0
    %1713 = vmatpush2.msra.mxu0 0.0
    %1714 = vmatprep.subr.mxu0 0.0
    %1715 = vmatpush2.msra.mxu0 0.0
    %1716 = vmatprep.mubr.f32.mxu0 0.0
    %1717 = vmatmul.mubr.f32.gmra.mxu0 %v1124
    %v1718 = vpop.f32.mrf.mxu0
    %v1719 = vadd.f32 %v1650, %v1718
    %v1720 = vpop.f32.mrf.mxu0
    %1721 = vmatprep.mubr.f32.mxu0 0.0
    %1722 = vmatmul.mubr.f32.gmra.mxu0 %v1127
    %v1723 = vpop.f32.mrf.mxu0
    %v1724 = vadd.f32 %v1650, %v1723
    %v1725 = vpop.f32.mrf.mxu0
    %1726 = vdwg.mxu0
    %v1727 = vadd.f32 %v1719, %v1552
    %v1728 = vadd.f32 %v1724, %v1553
    %v1729 = vsel %vm490, %v1727, 0.0
    %v1730 = vrot.slane %v1729, 4
    %v1731 = vadd.f32 %v1729, %v1730
    %v1732 = vrot.slane %v1731, 2
    %v1733 = vadd.f32 %v1731, %v1732
    %v1734 = vrot.slane %v1733, 1
    %v1735 = vadd.f32 %v1733, %v1734
    %v1736 = vmul.f32 %v1735, %v1013
    %v1737 = vsel %vm490, %v1728, 0.0
    %v1738 = vrot.slane %v1737, 4
    %v1739 = vadd.f32 %v1737, %v1738
    %v1740 = vrot.slane %v1739, 2
    %v1741 = vadd.f32 %v1739, %v1740
    %v1742 = vrot.slane %v1741, 1
    %v1743 = vadd.f32 %v1741, %v1742
    %v1744 = vmul.f32 %v1743, %v1013
    %v1745 = vsel %vm1023, %v1736, %v1744
    %v1746 = vld [vmem:[#allocation7] sm:$0x3]
    %1748 = vrot.lane.b32.xlu0 %v1745, 16
    %v1749 = vpop.permute.xlu0 %1748
    %1752 = vrot.lane.b32.xlu0 %v1746, 32
    %v1753 = vpop.permute.xlu0 %1752
    %v1755 = vsel %vm398, %v1024, %v1749
    %v1756 = vsel %vm490, %v1755, %v1753
    %v1757 = vld [vmem:[%s45] sm:$0xff]
    %v1758 = vld [vmem:[%s45 + $0x8] sm:$0xff]
    %v1759 = vld [vmem:[%s45 + $0x10] sm:$0xff]
    %v1760 = vld [vmem:[%s45 + $0x18] sm:$0xff]
    %v1761 = vld [vmem:[%s45 + $0x20] sm:$0xff]
    %vm1762 = vcmask 326656
    %v1764 = vsel %vm1762, %v1756, 0
    %1766 = vmatprep.subr.mxu0 0.0
    %1767 = vmatpush1.msra.mxu0 0.0
    %1768 = vmatprep.subr.mxu0 0.0
    %1769 = vmatpush1.msra.mxu0 0.0
    %1770 = vmatprep.subr.mxu0 0.0
    %1771 = vmatpush1.msra.mxu0 0.0
    %1772 = vmatprep.subr.mxu0 0.0
    %1773 = vmatpush1.msra.mxu0 0.0
    %1774 = vmatprep.subr.mxu0 0.0
    %1775 = vmatpush1.msra.mxu0 0.0
    %1776 = vmatprep.subr.mxu0 0.0
    %1777 = vmatpush1.msra.mxu0 0.0
    %1778 = vmatprep.subr.mxu0 0.0
    %1779 = vmatpush1.msra.mxu0 0.0
    %1780 = vmatprep.subr.mxu0 0.0
    %1781 = vmatpush1.msra.mxu0 0.0
    %1782 = vmatprep.subr.mxu0 0.0
    %1783 = vmatpush1.msra.mxu0 0.0
    %1784 = vmatprep.subr.mxu0 0.0
    %1785 = vmatpush1.msra.mxu0 0.0
    %1786 = vmatprep.subr.mxu0 0.0
    %1787 = vmatpush1.msra.mxu0 0.0
    %1788 = vmatprep.subr.mxu0 0.0
    %1789 = vmatpush1.msra.mxu0 %v1761
    %1790 = vmatprep.subr.mxu0 0.0
    %1791 = vmatpush1.msra.mxu0 %v1760
    %1792 = vmatprep.subr.mxu0 0.0
    %1793 = vmatpush1.msra.mxu0 %v1759
    %1794 = vmatprep.subr.mxu0 0.0
    %1795 = vmatpush1.msra.mxu0 %v1758
    %1796 = vmatprep.subr.mxu0 0.0
    %1797 = vmatpush1.msra.mxu0 %v1757
    %1798 = vmatprep.subr.mxu0 0.0
    %1799 = vmatpush2.msra.mxu0 0.0
    %1800 = vmatprep.subr.mxu0 0.0
    %1801 = vmatpush2.msra.mxu0 0.0
    %1802 = vmatprep.subr.mxu0 0.0
    %1803 = vmatpush2.msra.mxu0 0.0
    %1804 = vmatprep.subr.mxu0 0.0
    %1805 = vmatpush2.msra.mxu0 0.0
    %1806 = vmatprep.subr.mxu0 0.0
    %1807 = vmatpush2.msra.mxu0 0.0
    %1808 = vmatprep.subr.mxu0 0.0
    %1809 = vmatpush2.msra.mxu0 0.0
    %1810 = vmatprep.subr.mxu0 0.0
    %1811 = vmatpush2.msra.mxu0 0.0
    %1812 = vmatprep.subr.mxu0 0.0
    %1813 = vmatpush2.msra.mxu0 0.0
    %1814 = vmatprep.subr.mxu0 0.0
    %1815 = vmatpush2.msra.mxu0 0.0
    %1816 = vmatprep.subr.mxu0 0.0
    %1817 = vmatpush2.msra.mxu0 0.0
    %1818 = vmatprep.subr.mxu0 0.0
    %1819 = vmatpush2.msra.mxu0 0.0
    %1820 = vmatprep.subr.mxu0 0.0
    %1821 = vmatpush2.msra.mxu0 0.0
    %1822 = vmatprep.subr.mxu0 0.0
    %1823 = vmatpush2.msra.mxu0 0.0
    %1824 = vmatprep.subr.mxu0 0.0
    %1825 = vmatpush2.msra.mxu0 0.0
    %1826 = vmatprep.subr.mxu0 0.0
    %1827 = vmatpush2.msra.mxu0 0.0
    %1828 = vmatprep.subr.mxu0 0.0
    %1829 = vmatpush2.msra.mxu0 0.0
    %1830 = vmatprep.mubr.f32.mxu0 0.0
    %1831 = vmatmul.mubr.f32.gmra.mxu0 %v1764
    %v1832 = vpop.f32.mrf.mxu0
    %v1833 = vadd.f32 0.0, %v1832
    %v1834 = vpop.f32.mrf.mxu0
    %1835 = vdwg.mxu0
    %v1836 = vtanh.pop %v1833
    %v1837 = vld [vmem:[%s47] sm:$0xff]
    %v1838 = vld [vmem:[%s47 + $0x8] sm:$0xff]
    %v1839 = vld [vmem:[%s47 + $0x10] sm:$0xff]
    %v1840 = vld [vmem:[%s47 + $0x18] sm:$0xff]
    %v1841 = vld [vmem:[%s47 + $0x20] sm:$0xff]
    %v1842 = vld [vmem:[%s47 + $0x28] sm:$0xff]
    %v1843 = vld [vmem:[%s47 + $0x30] sm:$0xff]
    %v1844 = vld [vmem:[%s47 + $0x38] sm:$0xff]
    %vm1845 = vcmask 523264
    %v1847 = vsel %vm1845, %v1836, 0
    %1849 = vmatprep.subr.mxu0 0.0
    %1850 = vmatpush1.msra.mxu0 0.0
    %1851 = vmatprep.subr.mxu0 0.0
    %1852 = vmatpush1.msra.mxu0 0.0
    %1853 = vmatprep.subr.mxu0 0.0
    %1854 = vmatpush1.msra.mxu0 0.0
    %1855 = vmatprep.subr.mxu0 0.0
    %1856 = vmatpush1.msra.mxu0 0.0
    %1857 = vmatprep.subr.mxu0 0.0
    %1858 = vmatpush1.msra.mxu0 0.0
    %1859 = vmatprep.subr.mxu0 0.0
    %1860 = vmatpush1.msra.mxu0 0.0
    %1861 = vmatprep.subr.mxu0 0.0
    %1862 = vmatpush1.msra.mxu0 0.0
    %1863 = vmatprep.subr.mxu0 0.0
    %1864 = vmatpush1.msra.mxu0 0.0
    %1865 = vmatprep.subr.mxu0 0.0
    %1866 = vmatpush1.msra.mxu0 %v1844
    %1867 = vmatprep.subr.mxu0 0.0
    %1868 = vmatpush1.msra.mxu0 %v1843
    %1869 = vmatprep.subr.mxu0 0.0
    %1870 = vmatpush1.msra.mxu0 %v1842
    %1871 = vmatprep.subr.mxu0 0.0
    %1872 = vmatpush1.msra.mxu0 %v1841
    %1873 = vmatprep.subr.mxu0 0.0
    %1874 = vmatpush1.msra.mxu0 %v1840
    %1875 = vmatprep.subr.mxu0 0.0
    %1876 = vmatpush1.msra.mxu0 %v1839
    %1877 = vmatprep.subr.mxu0 0.0
    %1878 = vmatpush1.msra.mxu0 %v1838
    %1879 = vmatprep.subr.mxu0 0.0
    %1880 = vmatpush1.msra.mxu0 %v1837
    %1881 = vmatprep.subr.mxu0 0.0
    %1882 = vmatpush2.msra.mxu0 0.0
    %1883 = vmatprep.subr.mxu0 0.0
    %1884 = vmatpush2.msra.mxu0 0.0
    %1885 = vmatprep.subr.mxu0 0.0
    %1886 = vmatpush2.msra.mxu0 0.0
    %1887 = vmatprep.subr.mxu0 0.0
    %1888 = vmatpush2.msra.mxu0 0.0
    %1889 = vmatprep.subr.mxu0 0.0
    %1890 = vmatpush2.msra.mxu0 0.0
    %1891 = vmatprep.subr.mxu0 0.0
    %1892 = vmatpush2.msra.mxu0 0.0
    %1893 = vmatprep.subr.mxu0 0.0
    %1894 = vmatpush2.msra.mxu0 0.0
    %1895 = vmatprep.subr.mxu0 0.0
    %1896 = vmatpush2.msra.mxu0 0.0
    %1897 = vmatprep.subr.mxu0 0.0
    %1898 = vmatpush2.msra.mxu0 0.0
    %1899 = vmatprep.subr.mxu0 0.0
    %1900 = vmatpush2.msra.mxu0 0.0
    %1901 = vmatprep.subr.mxu0 0.0
    %1902 = vmatpush2.msra.mxu0 0.0
    %1903 = vmatprep.subr.mxu0 0.0
    %1904 = vmatpush2.msra.mxu0 0.0
    %1905 = vmatprep.subr.mxu0 0.0
    %1906 = vmatpush2.msra.mxu0 0.0
    %1907 = vmatprep.subr.mxu0 0.0
    %1908 = vmatpush2.msra.mxu0 0.0
    %1909 = vmatprep.subr.mxu0 0.0
    %1910 = vmatpush2.msra.mxu0 0.0
    %1911 = vmatprep.subr.mxu0 0.0
    %1912 = vmatpush2.msra.mxu0 0.0
    %1913 = vmatprep.mubr.f32.mxu0 0.0
    %1914 = vmatmul.mubr.f32.gmra.mxu0 %v1847
    %v1915 = vpop.f32.mrf.mxu0
    %v1916 = vadd.f32 0.0, %v1915
    %v1917 = vpop.f32.mrf.mxu0
    %1918 = vdwg.mxu0
    %v1919 = vtanh.pop %v1916
    %v1920 = vld [vmem:[%s49] sm:$0xff]
    %v1921 = vld [vmem:[%s49 + $0x8] sm:$0xff]
    %v1922 = vld [vmem:[%s49 + $0x10] sm:$0xff]
    %v1923 = vld [vmem:[%s49 + $0x18] sm:$0xff]
    %v1924 = vld [vmem:[#allocation2] sm:$0x1]
    %v1926 = vlaneseq
    %v1927 = vshrl.u32 %v1926, 7
    %v1928 = vsub.s32 0, %v1927
    %v1929 = vrot.slane %v1924, %v1928
    %v1932 = vsel %vm490, %v1919, 0
    %1934 = vmatprep.subr.mxu0 0.0
    %1935 = vmatpush1.msra.mxu0 0.0
    %1936 = vmatprep.subr.mxu0 0.0
    %1937 = vmatpush1.msra.mxu0 0.0
    %1938 = vmatprep.subr.mxu0 0.0
    %1939 = vmatpush1.msra.mxu0 0.0
    %1940 = vmatprep.subr.mxu0 0.0
    %1941 = vmatpush1.msra.mxu0 0.0
    %1942 = vmatprep.subr.mxu0 0.0
    %1943 = vmatpush1.msra.mxu0 0.0
    %1944 = vmatprep.subr.mxu0 0.0
    %1945 = vmatpush1.msra.mxu0 0.0
    %1946 = vmatprep.subr.mxu0 0.0
    %1947 = vmatpush1.msra.mxu0 0.0
    %1948 = vmatprep.subr.mxu0 0.0
    %1949 = vmatpush1.msra.mxu0 0.0
    %1950 = vmatprep.subr.mxu0 0.0
    %1951 = vmatpush1.msra.mxu0 0.0
    %1952 = vmatprep.subr.mxu0 0.0
    %1953 = vmatpush1.msra.mxu0 0.0
    %1954 = vmatprep.subr.mxu0 0.0
    %1955 = vmatpush1.msra.mxu0 0.0
    %1956 = vmatprep.subr.mxu0 0.0
    %1957 = vmatpush1.msra.mxu0 0.0
    %1958 = vmatprep.subr.mxu0 0.0
    %1959 = vmatpush1.msra.mxu0 %v1923
    %1960 = vmatprep.subr.mxu0 0.0
    %1961 = vmatpush1.msra.mxu0 %v1922
    %1962 = vmatprep.subr.mxu0 0.0
    %1963 = vmatpush1.msra.mxu0 %v1921
    %1964 = vmatprep.subr.mxu0 0.0
    %1965 = vmatpush1.msra.mxu0 %v1920
    %1966 = vmatprep.subr.mxu0 0.0
    %1967 = vmatpush2.msra.mxu0 0.0
    %1968 = vmatprep.subr.mxu0 0.0
    %1969 = vmatpush2.msra.mxu0 0.0
    %1970 = vmatprep.subr.mxu0 0.0
    %1971 = vmatpush2.msra.mxu0 0.0
    %1972 = vmatprep.subr.mxu0 0.0
    %1973 = vmatpush2.msra.mxu0 0.0
    %1974 = vmatprep.subr.mxu0 0.0
    %1975 = vmatpush2.msra.mxu0 0.0
    %1976 = vmatprep.subr.mxu0 0.0
    %1977 = vmatpush2.msra.mxu0 0.0
    %1978 = vmatprep.subr.mxu0 0.0
    %1979 = vmatpush2.msra.mxu0 0.0
    %1980 = vmatprep.subr.mxu0 0.0
    %1981 = vmatpush2.msra.mxu0 0.0
    %1982 = vmatprep.subr.mxu0 0.0
    %1983 = vmatpush2.msra.mxu0 0.0
    %1984 = vmatprep.subr.mxu0 0.0
    %1985 = vmatpush2.msra.mxu0 0.0
    %1986 = vmatprep.subr.mxu0 0.0
    %1987 = vmatpush2.msra.mxu0 0.0
    %1988 = vmatprep.subr.mxu0 0.0
    %1989 = vmatpush2.msra.mxu0 0.0
    %1990 = vmatprep.subr.mxu0 0.0
    %1991 = vmatpush2.msra.mxu0 0.0
    %1992 = vmatprep.subr.mxu0 0.0
    %1993 = vmatpush2.msra.mxu0 0.0
    %1994 = vmatprep.subr.mxu0 0.0
    %1995 = vmatpush2.msra.mxu0 0.0
    %1996 = vmatprep.subr.mxu0 0.0
    %1997 = vmatpush2.msra.mxu0 0.0
    %1998 = vmatprep.mubr.f32.mxu0 0.0
    %1999 = vmatmul.mubr.f32.gmra.mxu0 %v1932
    %v2000 = vpop.f32.mrf.mxu0
    %v2001 = vadd.f32 %v1929, %v2000
    %v2002 = vpop.f32.mrf.mxu0
    %2003 = vdwg.mxu0
    %v2004 = vld [vmem:[%s53] sm:$0xff]
    %v2005 = vld [vmem:[%s53 + $0x8] sm:$0xff]
    %v2006 = vld [vmem:[%s53 + $0x10] sm:$0xff]
    %v2007 = vld [vmem:[%s53 + $0x18] sm:$0xff]
    %v2008 = vld [vmem:[%s53 + $0x20] sm:$0xff]
    %v2009 = vld [vmem:[#allocation16] sm:$0x1]
    %v2011 = vlaneseq
    %v2012 = vshrl.u32 %v2011, 7
    %v2013 = vsub.s32 0, %v2012
    %v2014 = vrot.slane %v2009, %v2013
    %2016 = vmatprep.subr.mxu0 0.0
    %2017 = vmatpush1.msra.mxu0 0.0
    %2018 = vmatprep.subr.mxu0 0.0
    %2019 = vmatpush1.msra.mxu0 0.0
    %2020 = vmatprep.subr.mxu0 0.0
    %2021 = vmatpush1.msra.mxu0 0.0
    %2022 = vmatprep.subr.mxu0 0.0
    %2023 = vmatpush1.msra.mxu0 0.0
    %2024 = vmatprep.subr.mxu0 0.0
    %2025 = vmatpush1.msra.mxu0 0.0
    %2026 = vmatprep.subr.mxu0 0.0
    %2027 = vmatpush1.msra.mxu0 0.0
    %2028 = vmatprep.subr.mxu0 0.0
    %2029 = vmatpush1.msra.mxu0 0.0
    %2030 = vmatprep.subr.mxu0 0.0
    %2031 = vmatpush1.msra.mxu0 0.0
    %2032 = vmatprep.subr.mxu0 0.0
    %2033 = vmatpush1.msra.mxu0 0.0
    %2034 = vmatprep.subr.mxu0 0.0
    %2035 = vmatpush1.msra.mxu0 0.0
    %2036 = vmatprep.subr.mxu0 0.0
    %2037 = vmatpush1.msra.mxu0 0.0
    %2038 = vmatprep.subr.mxu0 0.0
    %2039 = vmatpush1.msra.mxu0 %v2008
    %2040 = vmatprep.subr.mxu0 0.0
    %2041 = vmatpush1.msra.mxu0 %v2007
    %2042 = vmatprep.subr.mxu0 0.0
    %2043 = vmatpush1.msra.mxu0 %v2006
    %2044 = vmatprep.subr.mxu0 0.0
    %2045 = vmatpush1.msra.mxu0 %v2005
    %2046 = vmatprep.subr.mxu0 0.0
    %2047 = vmatpush1.msra.mxu0 %v2004
    %2048 = vmatprep.subr.mxu0 0.0
    %2049 = vmatpush2.msra.mxu0 0.0
    %2050 = vmatprep.subr.mxu0 0.0
    %2051 = vmatpush2.msra.mxu0 0.0
    %2052 = vmatprep.subr.mxu0 0.0
    %2053 = vmatpush2.msra.mxu0 0.0
    %2054 = vmatprep.subr.mxu0 0.0
    %2055 = vmatpush2.msra.mxu0 0.0
    %2056 = vmatprep.subr.mxu0 0.0
    %2057 = vmatpush2.msra.mxu0 0.0
    %2058 = vmatprep.subr.mxu0 0.0
    %2059 = vmatpush2.msra.mxu0 0.0
    %2060 = vmatprep.subr.mxu0 0.0
    %2061 = vmatpush2.msra.mxu0 0.0
    %2062 = vmatprep.subr.mxu0 0.0
    %2063 = vmatpush2.msra.mxu0 0.0
    %2064 = vmatprep.subr.mxu0 0.0
    %2065 = vmatpush2.msra.mxu0 0.0
    %2066 = vmatprep.subr.mxu0 0.0
    %2067 = vmatpush2.msra.mxu0 0.0
    %2068 = vmatprep.subr.mxu0 0.0
    %2069 = vmatpush2.msra.mxu0 0.0
    %2070 = vmatprep.subr.mxu0 0.0
    %2071 = vmatpush2.msra.mxu0 0.0
    %2072 = vmatprep.subr.mxu0 0.0
    %2073 = vmatpush2.msra.mxu0 0.0
    %2074 = vmatprep.subr.mxu0 0.0
    %2075 = vmatpush2.msra.mxu0 0.0
    %2076 = vmatprep.subr.mxu0 0.0
    %2077 = vmatpush2.msra.mxu0 0.0
    %2078 = vmatprep.subr.mxu0 0.0
    %2079 = vmatpush2.msra.mxu0 0.0
    %2080 = vmatprep.mubr.f32.mxu0 0.0
    %2081 = vmatmul.mubr.f32.gmra.mxu0 %v1764
    %v2082 = vpop.f32.mrf.mxu0
    %v2083 = vadd.f32 %v2014, %v2082
    %v2084 = vpop.f32.mrf.mxu0
    %2085 = vdwg.mxu0
    %vm2086 = vcmp.ge.f32.partialorder %v2083, 0.0
    %v2087 = vmul.f32 %v2083, 0.2
    %v2088 = vsel %vm2086, %v2083, %v2087
    %v2089 = vld [vmem:[%s57] sm:$0xff]
    %v2090 = vld [vmem:[%s57 + $0x8] sm:$0xff]
    %v2091 = vld [vmem:[%s57 + $0x10] sm:$0xff]
    %v2092 = vld [vmem:[%s57 + $0x18] sm:$0xff]
    %v2093 = vld [vmem:[#allocation17] sm:$0x1]
    %v2095 = vlaneseq
    %v2096 = vshrl.u32 %v2095, 7
    %v2097 = vsub.s32 0, %v2096
    %v2098 = vrot.slane %v2093, %v2097
    %v2101 = vsel %vm490, %v2088, 0
    %2103 = vmatprep.subr.mxu0 0.0
    %2104 = vmatpush1.msra.mxu0 0.0
    %2105 = vmatprep.subr.mxu0 0.0
    %2106 = vmatpush1.msra.mxu0 0.0
    %2107 = vmatprep.subr.mxu0 0.0
    %2108 = vmatpush1.msra.mxu0 0.0
    %2109 = vmatprep.subr.mxu0 0.0
    %2110 = vmatpush1.msra.mxu0 0.0
    %2111 = vmatprep.subr.mxu0 0.0
    %2112 = vmatpush1.msra.mxu0 0.0
    %2113 = vmatprep.subr.mxu0 0.0
    %2114 = vmatpush1.msra.mxu0 0.0
    %2115 = vmatprep.subr.mxu0 0.0
    %2116 = vmatpush1.msra.mxu0 0.0
    %2117 = vmatprep.subr.mxu0 0.0
    %2118 = vmatpush1.msra.mxu0 0.0
    %2119 = vmatprep.subr.mxu0 0.0
    %2120 = vmatpush1.msra.mxu0 0.0
    %2121 = vmatprep.subr.mxu0 0.0
    %2122 = vmatpush1.msra.mxu0 0.0
    %2123 = vmatprep.subr.mxu0 0.0
    %2124 = vmatpush1.msra.mxu0 0.0
    %2125 = vmatprep.subr.mxu0 0.0
    %2126 = vmatpush1.msra.mxu0 0.0
    %2127 = vmatprep.subr.mxu0 0.0
    %2128 = vmatpush1.msra.mxu0 %v2092
    %2129 = vmatprep.subr.mxu0 0.0
    %2130 = vmatpush1.msra.mxu0 %v2091
    %2131 = vmatprep.subr.mxu0 0.0
    %2132 = vmatpush1.msra.mxu0 %v2090
    %2133 = vmatprep.subr.mxu0 0.0
    %2134 = vmatpush1.msra.mxu0 %v2089
    %2135 = vmatprep.subr.mxu0 0.0
    %2136 = vmatpush2.msra.mxu0 0.0
    %2137 = vmatprep.subr.mxu0 0.0
    %2138 = vmatpush2.msra.mxu0 0.0
    %2139 = vmatprep.subr.mxu0 0.0
    %2140 = vmatpush2.msra.mxu0 0.0
    %2141 = vmatprep.subr.mxu0 0.0
    %2142 = vmatpush2.msra.mxu0 0.0
    %2143 = vmatprep.subr.mxu0 0.0
    %2144 = vmatpush2.msra.mxu0 0.0
    %2145 = vmatprep.subr.mxu0 0.0
    %2146 = vmatpush2.msra.mxu0 0.0
    %2147 = vmatprep.subr.mxu0 0.0
    %2148 = vmatpush2.msra.mxu0 0.0
    %2149 = vmatprep.subr.mxu0 0.0
    %2150 = vmatpush2.msra.mxu0 0.0
    %2151 = vmatprep.subr.mxu0 0.0
    %2152 = vmatpush2.msra.mxu0 0.0
    %2153 = vmatprep.subr.mxu0 0.0
    %2154 = vmatpush2.msra.mxu0 0.0
    %2155 = vmatprep.subr.mxu0 0.0
    %2156 = vmatpush2.msra.mxu0 0.0
    %2157 = vmatprep.subr.mxu0 0.0
    %2158 = vmatpush2.msra.mxu0 0.0
    %2159 = vmatprep.subr.mxu0 0.0
    %2160 = vmatpush2.msra.mxu0 0.0
    %2161 = vmatprep.subr.mxu0 0.0
    %2162 = vmatpush2.msra.mxu0 0.0
    %2163 = vmatprep.subr.mxu0 0.0
    %2164 = vmatpush2.msra.mxu0 0.0
    %2165 = vmatprep.subr.mxu0 0.0
    %2166 = vmatpush2.msra.mxu0 0.0
    %2167 = vmatprep.mubr.f32.mxu0 0.0
    %2168 = vmatmul.mubr.f32.gmra.mxu0 %v2101
    %v2169 = vpop.f32.mrf.mxu0
    %v2170 = vadd.f32 %v2098, %v2169
    %v2171 = vpop.f32.mrf.mxu0
    %2172 = vdwg.mxu0
    %vm2173 = vcmp.ge.f32.partialorder %v2170, 0.0
    %v2174 = vmul.f32 %v2170, 0.2
    %v2175 = vsel %vm2173, %v2170, %v2174
    %v2176 = vld [vmem:[#allocation19] sm:$0xff]
    %v2177 = vld [vmem:[#allocation19 + $0x8] sm:$0xff]
    %v2178 = vld [vmem:[#allocation19 + $0x10] sm:$0xff]
    %v2179 = vld [vmem:[#allocation19 + $0x18] sm:$0xff]
    %v2180 = vld [vmem:[#allocation20] sm:$0x1]
    %v2182 = vlaneseq
    %v2183 = vshrl.u32 %v2182, 7
    %v2184 = vsub.s32 0, %v2183
    %v2185 = vrot.slane %v2180, %v2184
    %v2188 = vsel %vm490, %v2175, 0
    %2190 = vmatprep.subr.mxu0 0.0
    %2191 = vmatpush1.msra.mxu0 0.0
    %2192 = vmatprep.subr.mxu0 0.0
    %2193 = vmatpush1.msra.mxu0 0.0
    %2194 = vmatprep.subr.mxu0 0.0
    %2195 = vmatpush1.msra.mxu0 0.0
    %2196 = vmatprep.subr.mxu0 0.0
    %2197 = vmatpush1.msra.mxu0 0.0
    %2198 = vmatprep.subr.mxu0 0.0
    %2199 = vmatpush1.msra.mxu0 0.0
    %2200 = vmatprep.subr.mxu0 0.0
    %2201 = vmatpush1.msra.mxu0 0.0
    %2202 = vmatprep.subr.mxu0 0.0
    %2203 = vmatpush1.msra.mxu0 0.0
    %2204 = vmatprep.subr.mxu0 0.0
    %2205 = vmatpush1.msra.mxu0 0.0
    %2206 = vmatprep.subr.mxu0 0.0
    %2207 = vmatpush1.msra.mxu0 0.0
    %2208 = vmatprep.subr.mxu0 0.0
    %2209 = vmatpush1.msra.mxu0 0.0
    %2210 = vmatprep.subr.mxu0 0.0
    %2211 = vmatpush1.msra.mxu0 0.0
    %2212 = vmatprep.subr.mxu0 0.0
    %2213 = vmatpush1.msra.mxu0 0.0
    %2214 = vmatprep.subr.mxu0 0.0
    %2215 = vmatpush1.msra.mxu0 %v2179
    %2216 = vmatprep.subr.mxu0 0.0
    %2217 = vmatpush1.msra.mxu0 %v2178
    %2218 = vmatprep.subr.mxu0 0.0
    %2219 = vmatpush1.msra.mxu0 %v2177
    %2220 = vmatprep.subr.mxu0 0.0
    %2221 = vmatpush1.msra.mxu0 %v2176
    %2222 = vmatprep.subr.mxu0 0.0
    %2223 = vmatpush2.msra.mxu0 0.0
    %2224 = vmatprep.subr.mxu0 0.0
    %2225 = vmatpush2.msra.mxu0 0.0
    %2226 = vmatprep.subr.mxu0 0.0
    %2227 = vmatpush2.msra.mxu0 0.0
    %2228 = vmatprep.subr.mxu0 0.0
    %2229 = vmatpush2.msra.mxu0 0.0
    %2230 = vmatprep.subr.mxu0 0.0
    %2231 = vmatpush2.msra.mxu0 0.0
    %2232 = vmatprep.subr.mxu0 0.0
    %2233 = vmatpush2.msra.mxu0 0.0
    %2234 = vmatprep.subr.mxu0 0.0
    %2235 = vmatpush2.msra.mxu0 0.0
    %2236 = vmatprep.subr.mxu0 0.0
    %2237 = vmatpush2.msra.mxu0 0.0
    %2238 = vmatprep.subr.mxu0 0.0
    %2239 = vmatpush2.msra.mxu0 0.0
    %2240 = vmatprep.subr.mxu0 0.0
    %2241 = vmatpush2.msra.mxu0 0.0
    %2242 = vmatprep.subr.mxu0 0.0
    %2243 = vmatpush2.msra.mxu0 0.0
    %2244 = vmatprep.subr.mxu0 0.0
    %2245 = vmatpush2.msra.mxu0 0.0
    %2246 = vmatprep.subr.mxu0 0.0
    %2247 = vmatpush2.msra.mxu0 0.0
    %2248 = vmatprep.subr.mxu0 0.0
    %2249 = vmatpush2.msra.mxu0 0.0
    %2250 = vmatprep.subr.mxu0 0.0
    %2251 = vmatpush2.msra.mxu0 0.0
    %2252 = vmatprep.subr.mxu0 0.0
    %2253 = vmatpush2.msra.mxu0 0.0
    %2254 = vmatprep.mubr.f32.mxu0 0.0
    %2255 = vmatmul.mubr.f32.gmra.mxu0 %v2188
    %v2256 = vpop.f32.mrf.mxu0
    %v2257 = vadd.f32 %v2185, %v2256
    %v2258 = vpop.f32.mrf.mxu0
    %2259 = vdwg.mxu0
    %vm2260 = vcmp.ge.f32.partialorder %v2257, 0.0
    %v2261 = vmul.f32 %v2257, 0.2
    %v2262 = vsel %vm2260, %v2257, %v2261
    %v2263 = vld [vmem:[%s65] sm:$0xff]
    %v2264 = vld [vmem:[%s65 + $0x8] sm:$0xff]
    %v2265 = vld [vmem:[%s65 + $0x10] sm:$0xff]
    %v2266 = vld [vmem:[%s65 + $0x18] sm:$0xff]
    %v2267 = vld [vmem:[#allocation22] sm:$0x1]
    %v2269 = vlaneseq
    %v2270 = vshrl.u32 %v2269, 7
    %v2271 = vsub.s32 0, %v2270
    %v2272 = vrot.slane %v2267, %v2271
    %v2275 = vsel %vm490, %v2262, 0
    %2277 = vmatprep.subr.mxu0 0.0
    %2278 = vmatpush1.msra.mxu0 0.0
    %2279 = vmatprep.subr.mxu0 0.0
    %2280 = vmatpush1.msra.mxu0 0.0
    %2281 = vmatprep.subr.mxu0 0.0
    %2282 = vmatpush1.msra.mxu0 0.0
    %2283 = vmatprep.subr.mxu0 0.0
    %2284 = vmatpush1.msra.mxu0 0.0
    %2285 = vmatprep.subr.mxu0 0.0
    %2286 = vmatpush1.msra.mxu0 0.0
    %2287 = vmatprep.subr.mxu0 0.0
    %2288 = vmatpush1.msra.mxu0 0.0
    %2289 = vmatprep.subr.mxu0 0.0
    %2290 = vmatpush1.msra.mxu0 0.0
    %2291 = vmatprep.subr.mxu0 0.0
    %2292 = vmatpush1.msra.mxu0 0.0
    %2293 = vmatprep.subr.mxu0 0.0
    %2294 = vmatpush1.msra.mxu0 0.0
    %2295 = vmatprep.subr.mxu0 0.0
    %2296 = vmatpush1.msra.mxu0 0.0
    %2297 = vmatprep.subr.mxu0 0.0
    %2298 = vmatpush1.msra.mxu0 0.0
    %2299 = vmatprep.subr.mxu0 0.0
    %2300 = vmatpush1.msra.mxu0 0.0
    %2301 = vmatprep.subr.mxu0 0.0
    %2302 = vmatpush1.msra.mxu0 %v2266
    %2303 = vmatprep.subr.mxu0 0.0
    %2304 = vmatpush1.msra.mxu0 %v2265
    %2305 = vmatprep.subr.mxu0 0.0
    %2306 = vmatpush1.msra.mxu0 %v2264
    %2307 = vmatprep.subr.mxu0 0.0
    %2308 = vmatpush1.msra.mxu0 %v2263
    %2309 = vmatprep.subr.mxu0 0.0
    %2310 = vmatpush2.msra.mxu0 0.0
    %2311 = vmatprep.subr.mxu0 0.0
    %2312 = vmatpush2.msra.mxu0 0.0
    %2313 = vmatprep.subr.mxu0 0.0
    %2314 = vmatpush2.msra.mxu0 0.0
    %2315 = vmatprep.subr.mxu0 0.0
    %2316 = vmatpush2.msra.mxu0 0.0
    %2317 = vmatprep.subr.mxu0 0.0
    %2318 = vmatpush2.msra.mxu0 0.0
    %2319 = vmatprep.subr.mxu0 0.0
    %2320 = vmatpush2.msra.mxu0 0.0
    %2321 = vmatprep.subr.mxu0 0.0
    %2322 = vmatpush2.msra.mxu0 0.0
    %2323 = vmatprep.subr.mxu0 0.0
    %2324 = vmatpush2.msra.mxu0 0.0
    %2325 = vmatprep.subr.mxu0 0.0
    %2326 = vmatpush2.msra.mxu0 0.0
    %2327 = vmatprep.subr.mxu0 0.0
    %2328 = vmatpush2.msra.mxu0 0.0
    %2329 = vmatprep.subr.mxu0 0.0
    %2330 = vmatpush2.msra.mxu0 0.0
    %2331 = vmatprep.subr.mxu0 0.0
    %2332 = vmatpush2.msra.mxu0 0.0
    %2333 = vmatprep.subr.mxu0 0.0
    %2334 = vmatpush2.msra.mxu0 0.0
    %2335 = vmatprep.subr.mxu0 0.0
    %2336 = vmatpush2.msra.mxu0 0.0
    %2337 = vmatprep.subr.mxu0 0.0
    %2338 = vmatpush2.msra.mxu0 0.0
    %2339 = vmatprep.subr.mxu0 0.0
    %2340 = vmatpush2.msra.mxu0 0.0
    %2341 = vmatprep.mubr.f32.mxu0 0.0
    %2342 = vmatmul.mubr.f32.gmra.mxu0 %v2275
    %v2343 = vpop.f32.mrf.mxu0
    %v2344 = vadd.f32 %v2272, %v2343
    %v2345 = vpop.f32.mrf.mxu0
    %2346 = vdwg.mxu0
    %v2347 = vld [vmem:[%s11] sm:$0x3]
    %vm2348 = vcmp.gt.f32.partialorder %v2347, 0.5
    %v2349 = vsel %vm2348, -inf, %v2344
    %vm2350 = vcmask 82944
    %v2351 = vsel %vm2350, %v2349, -inf
    %2352 = vmax.xlane.f32.xlu0 %v2351
    %v2353 = vpop.xlane.xlu0 %2352
    %v2354 = vsub.f32 %v2349, %v2353
    %v2355 = vmul.f32 %v2354, 1.442695
    %v2356 = vpow.pop %v2355
    %v2357 = vsel %vm2350, %v2356, 0.0
    %2358 = vadd.xlane.f32.xlu0 %v2357
    %v2359 = vpop.xlane.xlu0 %2358
    %v2360 = vlog2.pop %v2359
    %v2361 = vmul.f32 %v2360, 0.6931472
    %v2362 = vsub.f32 %v2354, %v2361
    %2364 = vrot.lane.b32.xlu0 %v2001, 40
    %v2365 = vpop.permute.xlu0 %2364
    %2368 = vrot.lane.b32.xlu0 %v2362, 41
    %v2369 = vpop.permute.xlu0 %2368
    %v2371 = vsel %vm1762, %v1756, %v2365
    %vm2372 = vcmask 334848
    %v2373 = vsel %vm2372, %v2371, %v2369
    %vm2374 = vcmask 424960
    %v2375 = vsel %vm2374, %v2373, 0.0
    %2376 = vst [vmem:[%s69] sm:$0x3] %v2375
    // Predicated region
    $region190: #{gnn_feature_extractor_forward.1} parent=1 // pred_check
      _
    $region191: #{gnn_feature_extractor_forward.1} parent=1 // pred_check_branch
      %2378 = sbr.rel (0) target = $region193
    $region192: #{gnn_feature_extractor_forward.1} parent=1 // pred_region
      _
    $region193: #{gnn_feature_extractor_forward.1} parent=1 // pred_fallthru
      _
    // Predicated region
    $region194: #{gnn_feature_extractor_forward.1} parent=1 // pred_check
      _
    $region195: #{gnn_feature_extractor_forward.1} parent=1 // pred_check_branch
      %2380 = sbr.rel (0) target = $region197
    $region196: #{gnn_feature_extractor_forward.1} parent=1 // pred_region
      _
    $region197: #{gnn_feature_extractor_forward.1} parent=1 // pred_fallthru
      _
    %2381 = vsyncpa [#allocation4], 1
    %2382 = vsyncpa [#allocation6], 1
    %2383 = vsyncpa [#allocation9], 1
    %2384 = vsyncpa [#allocation12], 1
    %2385 = vsyncpa [#allocation15], 1
    %2386 = vsyncpa [#allocation18], 1
    %2387 = vsyncpa [#allocation21], 1

</llo_original>
